<compile_context>
chip_gen: v5e
topology: v5e:2x2
jax: 0.10.0
libtpu: 0.0.40
codegen_flags: <defaults>
</compile_context>

<pallas_src>
import functools

import jax
import jax.numpy as jnp
from jax.experimental import pallas as pl
from jax.experimental.pallas import tpu as pltpu


# ----------------------------------------------------------------------------
# Pallas kernel: per-point losses for one (batch, point-tile) block.
# ----------------------------------------------------------------------------
def _panoptic_point_kernel(sigma, ignore_index, n_points, tile_n,
                           sem_ref, gt_sem_ref, gt_ins_ref, hmap_ref, sq_ref,
                           neg_err_ref, fgc_ref, bce_ref, stats_ref):
    # ---- in-bounds mask for the (possibly partial) last point tile --------
    lane = jax.lax.broadcasted_iota(jnp.int32, (1, 1, tile_n), 2)
    inb = (pl.program_id(1) * tile_n + lane) < n_points          # (1,1,TN)

    # Native-dtype loads, widened to f32/i32 in-register; out-of-bounds lanes
    # are sanitized so no NaN/Inf can leak into the reductions.
    logits = jnp.where(inb, sem_ref[...].astype(jnp.float32), 0.0)   # (1,C,TN)
    gt = jnp.where(inb, gt_sem_ref[...].astype(jnp.int32), ignore_index)
    gt_ins = jnp.where(inb, gt_ins_ref[...].astype(jnp.int32), -1)
    p = jnp.where(inb, hmap_ref[...].astype(jnp.float32), 0.5)
    sq = jnp.where(inb, sq_ref[...].astype(jnp.float32), 0.0)

    # ---- semantic cross-entropy (ignore-masked) + softmax probabilities ---
    m = jnp.max(logits, axis=1, keepdims=True)                    # (1,1,TN)
    ex = jnp.exp(logits - m)
    se = jnp.sum(ex, axis=1, keepdims=True)
    probs = ex * pl.reciprocal(se, approx=True)                   # EUP slot
    lse = jnp.log(se) + m                                         # logsumexp
    cls_iota = jax.lax.broadcasted_iota(jnp.int32, logits.shape, 1)
    onehot = (cls_iota == gt).astype(jnp.float32)                 # (1,C,TN)
    valid = (gt != ignore_index).astype(jnp.float32)              # (1,1,TN)
    logit_gt = jnp.sum(onehot * logits, axis=1, keepdims=True)
    ce = (lse - logit_gt) * valid

    # ---- Lovasz per-class error, stored NEGATED (ascending-sort-ready) ----
    fgc = onehot * valid                                          # (1,C,TN)
    err = jnp.abs(fgc - probs) * valid
    neg_err_ref[...] = (-err)[0]                                  # (C,TN) f32
    fgc_ref[...] = fgc[0].astype(jnp.bfloat16)                    # (C,TN) bf16

    # ---- offset error / gaussian heat-map target / centre BCE -------------
    lpoint = jnp.sqrt(sq)
    fg = (gt_ins >= 0).astype(jnp.float32)                        # (1,1,TN)
    gthmap = jnp.exp(-sq * (1.0 / (2.0 * sigma * sigma))) * fg
    # NOTE: torch clamps log at -100; we use the same +1e-12 guard as the
    # reference BCE_OHEM, so parity is exact except when pred_hmap saturates.
    bce = -(gthmap * jnp.log(p + 1e-12)
            + (1.0 - gthmap) * jnp.log(1.0 - p + 1e-12))
    # invalid / out-of-range points pre-masked to -inf so OHEM top-k needs no
    # extra mask pass.
    bce_ref[...] = jnp.where(valid > 0.0, bce, -jnp.inf)[0]       # (1,TN)

    # ---- per-tile partial sums (replaces 5 full-length per-point streams) -
    s_ce = jnp.sum(ce)
    s_valid = jnp.sum(valid)
    s_off = jnp.sum(lpoint * fg)
    s_fg = jnp.sum(fg)
    s_bce = jnp.sum(bce * valid)
    row = jax.lax.broadcasted_iota(jnp.int32, stats_ref.shape, 2)
    stats_ref[...] = (jnp.where(row == 0, s_ce, 0.0)
                      + jnp.where(row == 1, s_valid, 0.0)
                      + jnp.where(row == 2, s_off, 0.0)
                      + jnp.where(row == 3, s_fg, 0.0)
                      + jnp.where(row == 4, s_bce, 0.0))


# ----------------------------------------------------------------------------
# Tiling / VMEM sizing helpers.
# ----------------------------------------------------------------------------
def _round_up(x, m):
    return ((x + m - 1) // m) * m


def _vmem_budget_and_limit():
    """Generation-aware VMEM sizing: big tiles on 128-MiB chips, safe on v7x."""
    try:
        cap = int(pltpu.get_tpu_info().vmem_capacity_bytes)
    except Exception:
        cap = 64 * 1024 * 1024
    if cap >= 100 * 1024 * 1024:            # v5e / v6e: 128 MiB physical VMEM
        return 40 * 1024 * 1024, 64 * 1024 * 1024
    return 20 * 1024 * 1024, 48 * 1024 * 1024   # v7x: 64 MiB per TensorCore


def _tiling(n, c, bs, vmem_budget):
    """Pick a point-tile TN and tile count from a VMEM budget."""
    c8 = _round_up(c, 8)
    c16 = _round_up(c, 16)
    # Double-buffered bytes/point incl. (8,128)/(16,128) sublane padding:
    # logits + neg_err (4*C8 each), fgc bf16 (2*C16), ~6 lane-dense scalar
    # streams (32 B each).
    per_point = 2 * (8 * c8 + 2 * c16 + 192)
    cap = (vmem_budget // per_point) // 128 * 128
    cap = max(256, min(32768, cap))
    tn = min(_round_up(n, 128), cap)
    nt = -(-n // tn)
    # Guarantee >=2 parallel grid iterations so both v7x TensorCores get work.
    if bs * nt < 2 and tn > 128:
        tn = _round_up(-(-n // 2), 128)
        nt = -(-n // tn)
    return tn, nt


# ----------------------------------------------------------------------------
# pallas_call wrapper for the per-point kernel.
# ----------------------------------------------------------------------------
def _pointwise_losses(logits, gt_sem, gt_ins, hmap, sqdist,
                      sigma, ignore_index, n_points, tile_n, n_tiles,
                      vmem_limit):
    BS, C, _ = logits.shape
    P = BS * n_tiles * tile_n

    row3 = lambda b, j: (b, 0, j)
    flat = lambda b, j: (0, b * n_tiles + j)

    kern = functools.partial(_panoptic_point_kernel, float(sigma),
                             int(ignore_index), int(n_points), int(tile_n))
    return pl.pallas_call(
        kern,
        grid=(BS, n_tiles),
        in_specs=[
            pl.BlockSpec((1, C, tile_n), row3),     # logits (native dtype)
            pl.BlockSpec((1, 1, tile_n), row3),     # gt_sem (native int)
            pl.BlockSpec((1, 1, tile_n), row3),     # gt_ins (native int)
            pl.BlockSpec((1, 1, tile_n), row3),     # pred_hmap (native dtype)
            pl.BlockSpec((1, 1, tile_n), row3),     # squared offset error f32
        ],
        out_specs=[
            pl.BlockSpec((C, tile_n), flat),                          # -err
            pl.BlockSpec((C, tile_n), flat),                          # fg 1-hot
            pl.BlockSpec((1, tile_n), flat),                          # bce
            pl.BlockSpec((1, 1, 8, 128), lambda b, j: (b, j, 0, 0)),  # sums
        ],
        out_shape=[
            jax.ShapeDtypeStruct((C, P), jnp.float32),
            jax.ShapeDtypeStruct((C, P), jnp.bfloat16),
            jax.ShapeDtypeStruct((1, P), jnp.float32),
            jax.ShapeDtypeStruct((BS, n_tiles, 8, 128), jnp.float32),
        ],
        compiler_params=pltpu.CompilerParams(
            dimension_semantics=("parallel", "parallel"),
            vmem_limit_bytes=int(vmem_limit)),
    )(logits, gt_sem, gt_ins, hmap, sqdist)


# ----------------------------------------------------------------------------
# Full forward (jit-able, no host syncs).
# ----------------------------------------------------------------------------
def _panoptic_forward(ce_w, lov_w, cen_w, off_w, sigma, ignore_index,
                      top_ratio, top_weight, vmem_budget, vmem_limit,
                      pred_sem, pred_offset, pred_hmap,
                      gt_offset, gt_ins_label, gt_sem):
    BS, C, N, _ = pred_sem.shape
    # Pure reshapes (trailing size-1 squeeze) — no dtype casts, no pads.
    logits = pred_sem[..., 0]                                   # (BS,C,N)
    gt_sem_i = gt_sem[..., 0][:, None, :]                       # (BS,1,N)
    gt_ins_i = gt_ins_label[..., 0][:, None, :]                 # (BS,1,N)
    hmap = pred_hmap[..., 0][:, None, :]                        # (BS,1,N)
    # Squared offset error reduced over the 3-wide minor dim in XLA (fused);
    # keeps the kernel lane-dense and avoids (BS,N,3) transposes.
    d = pred_offset.astype(jnp.float32) - gt_offset.astype(jnp.float32)
    sqdist = jnp.sum(d * d, axis=2)[:, None, :]                 # (BS,1,N) f32

    tn, nt = _tiling(N, C, BS, vmem_budget)

    neg_err, fgc, bce, stats = _pointwise_losses(
        logits, gt_sem_i, gt_ins_i, hmap, sqdist,
        sigma, ignore_index, N, tn, nt, vmem_limit)

    sums = jnp.sum(stats[:, :, :, 0], axis=(0, 1))              # (8,)
    s_ce, s_valid, s_off, s_fg, s_bce = sums[0], sums[1], sums[2], sums[3], sums[4]

    # semantic CE: mean over non-ignored points (torch CE w/ ignore_index)
    loss_ce = s_ce / jnp.maximum(s_valid, 1.0)

    # offset loss: mean L2 error over foreground points
    loss_offset = s_off / (s_fg + 1e-12)

    # centre loss: BCE_OHEM over valid points (sum/valid + top-k mean).
    # top-k over a *static* bound; runtime k is a traced int (no recompiles).
    loss_center = s_bce / (s_valid + 1e-12)
    if top_ratio > 0.0:
        bce_flat = bce[0]                                       # (BS*nt*tn,)
        kmax = max(1, min(int(bce_flat.shape[0]), int(top_ratio * BS * N) + 1))
        topk_vals = jax.lax.top_k(bce_flat, kmax)[0]            # descending
        cleaned = jnp.where(jnp.isfinite(topk_vals), topk_vals, 0.0)
        csum = jnp.cumsum(cleaned)
        k = jnp.minimum(jnp.floor(s_valid * top_ratio).astype(jnp.int32), kmax)
        idx = jnp.clip(k - 1, 0, kmax - 1)
        topk_mean = csum[idx] / jnp.maximum(k.astype(jnp.float32), 1.0)
        loss_center = loss_center + jnp.where(k > 0, top_weight * topk_mean, 0.0)

    # Lovasz-softmax (classes='present', per_image=False) on softmax probs.
    # TODO(synk): lovasz_softmax source not given in the reference module; this
    # follows the standard Berman formulation. The per-class descending sort
    # has no clean Pallas equivalent, so it runs as one batched lax.sort in XLA
    # (kernel already emits the negated f32 key and bf16 payload).
    neg_err_sorted, fg_sorted = jax.lax.sort((neg_err, fgc), dimension=1,
                                             num_keys=1)
    fg_sorted = fg_sorted.astype(jnp.float32)                   # for exact cumsum
    gts = jnp.sum(fg_sorted, axis=1, keepdims=True)             # (C,1)
    csum_fg = jnp.cumsum(fg_sorted, axis=1)
    inter = gts - csum_fg
    pos = jax.lax.broadcasted_iota(jnp.float32, fg_sorted.shape, 1) + 1.0
    union = gts + pos - csum_fg                                 # single cumsum
    jac = 1.0 - inter / union
    grad = jnp.concatenate([jac[:, :1], jac[:, 1:] - jac[:, :-1]], axis=1)
    loss_per_class = -jnp.sum(neg_err_sorted * grad, axis=1)    # (C,)
    present = (gts[:, 0] > 0).astype(jnp.float32)
    loss_lovasz = (jnp.sum(present * loss_per_class)
                   / jnp.maximum(jnp.sum(present), 1.0))

    return (ce_w * loss_ce + lov_w * loss_lovasz
            + cen_w * loss_center + off_w * loss_offset)


class PanopticLossV2:
    """JAX/Pallas port of PanopticLossv2 (seg loss branch: 'ce')."""

    def __init__(self, ce_weight, lovasz_weight, center_weight, offset_weight,
                 sigma, ignore_index, loss_seg_dic, loss_ins_dic):
        if loss_seg_dic["type"] != "ce":
            # TODO(synk): only the plain CrossEntropy ('ce') seg branch is
            # ported; 'ohem' / 'wce' branches are not instantiated here.
            raise NotImplementedError("only loss_seg_dic['type']=='ce' is implemented")
        budget, limit = _vmem_budget_and_limit()
        self._fwd = jax.jit(functools.partial(
            _panoptic_forward,
            float(ce_weight), float(lovasz_weight), float(center_weight),
            float(offset_weight), float(sigma), int(ignore_index),
            float(loss_ins_dic["top_ratio"]), float(loss_ins_dic["top_weight"]),
            int(budget), int(limit)))

    def __call__(self, pred_sem, pred_offset, pred_hmap,
                 gt_offset, gt_ins_label, gt_sem):
        return self._fwd(pred_sem, pred_offset, pred_hmap,
                         gt_offset, gt_ins_label, gt_sem)


if __name__ == "__main__":
    key = jax.random.PRNGKey(0)
    BS, C, N = 2, 8, 1024
    k1, k2, k3, k4, k5, k6 = jax.random.split(key, 6)

    pred_sem = jax.random.normal(k1, (BS, C, N, 1), dtype=jnp.float32)
    pred_offset = jax.random.normal(k2, (BS, N, 3), dtype=jnp.float32)
    pred_hmap = jax.nn.sigmoid(jax.random.normal(k3, (BS, N, 1), dtype=jnp.float32))
    gt_offset = jax.random.normal(k4, (BS, N, 3), dtype=jnp.float32)
    gt_ins_label = jax.random.randint(k5, (BS, N, 1), -1, 6, dtype=jnp.int32)
    gt_sem = jax.random.randint(k6, (BS, N, 1), 0, C, dtype=jnp.int32)

    loss_fn = PanopticLossV2(
        ce_weight=1.0, lovasz_weight=1.0, center_weight=1.0, offset_weight=1.0,
        sigma=1.0, ignore_index=0,
        loss_seg_dic={"type": "ce"},
        loss_ins_dic={"top_ratio": 0.3, "top_weight": 1.0})

    total = loss_fn(pred_sem, pred_offset, pred_hmap,
                    gt_offset, gt_ins_label, gt_sem)
    total = jax.block_until_ready(total)
    assert total.shape == () and bool(jnp.isfinite(total))
    print("KERNEL_OK")
</pallas_src>

<mosaic_0001>
module attributes {stable_mosaic.version = 11 : i64} {
  func.func @_panoptic_point_kernel(%arg0: i32, %arg1: i32, %arg2: memref<1x8x1024xf32, #tpu.memory_space<vmem>>, %arg3: memref<1x1x1024xi32, #tpu.memory_space<vmem>>, %arg4: memref<1x1x1024xi32, #tpu.memory_space<vmem>>, %arg5: memref<1x1x1024xf32, #tpu.memory_space<vmem>>, %arg6: memref<1x1x1024xf32, #tpu.memory_space<vmem>>, %arg7: memref<8x1024xf32, #tpu.memory_space<vmem>>, %arg8: memref<8x1024xbf16, #tpu.memory_space<vmem>>, %arg9: memref<1x1024xf32, #tpu.memory_space<vmem>>, %arg10: memref<1x1x8x128xf32, #tpu.memory_space<vmem>>) attributes {dimension_semantics = [#tpu.dimension_semantics<parallel>, #tpu.dimension_semantics<parallel>], iteration_bounds = array<i64: 2, 1>, scalar_prefetch = 0 : i64, scratch_operands = 0 : i64, tpu.core_type = #tpu.core_type<tc>, window_params = [{transform_indices = @transform_0, window_bounds = array<i64: 1, 8, 1024>}, {transform_indices = @transform_1, window_bounds = array<i64: 1, 1, 1024>}, {transform_indices = @transform_2, window_bounds = array<i64: 1, 1, 1024>}, {transform_indices = @transform_3, window_bounds = array<i64: 1, 1, 1024>}, {transform_indices = @transform_4, window_bounds = array<i64: 1, 1, 1024>}, {transform_indices = @transform_5, window_bounds = array<i64: 8, 1024>}, {transform_indices = @transform_6, window_bounds = array<i64: 8, 1024>}, {transform_indices = @transform_7, window_bounds = array<i64: 1, 1024>}, {transform_indices = @transform_8, window_bounds = array<i64: 1, 1, 8, 128>}]} {
    %0 = tpu.iota {dimensions = array<i32: 2>} : vector<1x1x1024xi32>
    %c1024_i32 = arith.constant 1024 : i32
    %1 = arith.muli %arg1, %c1024_i32 : i32
    %2 = vector.broadcast %1 : i32 to vector<1x1x1024xi32>
    %3 = arith.addi %2, %0 : vector<1x1x1024xi32>
    %c1024_i32_0 = arith.constant 1024 : i32
    %4 = vector.broadcast %c1024_i32_0 : i32 to vector<1x1x1024xi32>
    %5 = arith.cmpi slt, %3, %4 : vector<1x1x1024xi32>
    %c0 = arith.constant 0 : index
    %c0_1 = arith.constant 0 : index
    %c0_2 = arith.constant 0 : index
    %6 = vector.load %arg2[%c0, %c0_1, %c0_2] : memref<1x8x1024xf32, #tpu.memory_space<vmem>>, vector<1x8x1024xf32>
    %cst = arith.constant 0.000000e+00 : f32
    %7 = vector.shape_cast %5 : vector<1x1x1024xi1> to vector<1x1x1024xi1>
    %8 = vector.broadcast %7 : vector<1x1x1024xi1> to vector<1x8x1024xi1>
    %9 = vector.broadcast %cst : f32 to vector<1x8x1024xf32>
    %10 = arith.select %8, %6, %9 : vector<1x8x1024xi1>, vector<1x8x1024xf32>
    %c0_3 = arith.constant 0 : index
    %c0_4 = arith.constant 0 : index
    %c0_5 = arith.constant 0 : index
    %11 = vector.load %arg3[%c0_3, %c0_4, %c0_5] : memref<1x1x1024xi32, #tpu.memory_space<vmem>>, vector<1x1x1024xi32>
    %c0_i32 = arith.constant 0 : i32
    %12 = vector.broadcast %c0_i32 : i32 to vector<1x1x1024xi32>
    %13 = arith.select %5, %11, %12 : vector<1x1x1024xi1>, vector<1x1x1024xi32>
    %c0_6 = arith.constant 0 : index
    %c0_7 = arith.constant 0 : index
    %c0_8 = arith.constant 0 : index
    %14 = vector.load %arg4[%c0_6, %c0_7, %c0_8] : memref<1x1x1024xi32, #tpu.memory_space<vmem>>, vector<1x1x1024xi32>
    %c-1_i32 = arith.constant -1 : i32
    %15 = vector.broadcast %c-1_i32 : i32 to vector<1x1x1024xi32>
    %16 = arith.select %5, %14, %15 : vector<1x1x1024xi1>, vector<1x1x1024xi32>
    %c0_9 = arith.constant 0 : index
    %c0_10 = arith.constant 0 : index
    %c0_11 = arith.constant 0 : index
    %17 = vector.load %arg5[%c0_9, %c0_10, %c0_11] : memref<1x1x1024xf32, #tpu.memory_space<vmem>>, vector<1x1x1024xf32>
    %cst_12 = arith.constant 5.000000e-01 : f32
    %18 = vector.broadcast %cst_12 : f32 to vector<1x1x1024xf32>
    %19 = arith.select %5, %17, %18 : vector<1x1x1024xi1>, vector<1x1x1024xf32>
    %c0_13 = arith.constant 0 : index
    %c0_14 = arith.constant 0 : index
    %c0_15 = arith.constant 0 : index
    %20 = vector.load %arg6[%c0_13, %c0_14, %c0_15] : memref<1x1x1024xf32, #tpu.memory_space<vmem>>, vector<1x1x1024xf32>
    %cst_16 = arith.constant 0.000000e+00 : f32
    %21 = vector.broadcast %cst_16 : f32 to vector<1x1x1024xf32>
    %22 = arith.select %5, %20, %21 : vector<1x1x1024xi1>, vector<1x1x1024xf32>
    %cst_17 = arith.constant dense<0xFF800000> : vector<1x1024xf32>
    %23 = vector.multi_reduction <maximumf>, %10, %cst_17 [1] : vector<1x8x1024xf32> to vector<1x1024xf32>
    %24 = vector.shape_cast %23 : vector<1x1024xf32> to vector<1x1x1024xf32>
    %25 = vector.broadcast %24 : vector<1x1x1024xf32> to vector<1x8x1024xf32>
    %26 = arith.subf %10, %25 : vector<1x8x1024xf32>
    %27 = math.exp %26 : vector<1x8x1024xf32>
    %cst_18 = arith.constant dense<0.000000e+00> : vector<1x1024xf32>
    %28 = vector.multi_reduction <add>, %27, %cst_18 [1] : vector<1x8x1024xf32> to vector<1x1024xf32>
    %29 = vector.shape_cast %28 : vector<1x1024xf32> to vector<1x1x1024xf32>
    %30 = tpu.reciprocal %29 {approx = true} : vector<1x1x1024xf32> -> vector<1x1x1024xf32>
    %31 = vector.broadcast %30 : vector<1x1x1024xf32> to vector<1x8x1024xf32>
    %32 = arith.mulf %27, %31 : vector<1x8x1024xf32>
    %33 = math.log %29 : vector<1x1x1024xf32>
    %34 = arith.addf %33, %24 : vector<1x1x1024xf32>
    %35 = tpu.iota {dimensions = array<i32: 1>} : vector<1x8x1024xi32>
    %36 = vector.broadcast %13 : vector<1x1x1024xi32> to vector<1x8x1024xi32>
    %37 = arith.cmpi eq, %35, %36 : vector<1x8x1024xi32>
    %38 = arith.extui %37 : vector<1x8x1024xi1> to vector<1x8x1024xi32>
    %39 = arith.sitofp %38 : vector<1x8x1024xi32> to vector<1x8x1024xf32>
    %c0_i32_19 = arith.constant 0 : i32
    %40 = vector.broadcast %c0_i32_19 : i32 to vector<1x1x1024xi32>
    %41 = arith.cmpi ne, %13, %40 : vector<1x1x1024xi32>
    %42 = arith.extui %41 : vector<1x1x1024xi1> to vector<1x1x1024xi32>
    %43 = arith.sitofp %42 : vector<1x1x1024xi32> to vector<1x1x1024xf32>
    %44 = arith.mulf %39, %10 : vector<1x8x1024xf32>
    %cst_20 = arith.constant dense<0.000000e+00> : vector<1x1024xf32>
    %45 = vector.multi_reduction <add>, %44, %cst_20 [1] : vector<1x8x1024xf32> to vector<1x1024xf32>
    %46 = vector.shape_cast %45 : vector<1x1024xf32> to vector<1x1x1024xf32>
    %47 = arith.subf %34, %46 : vector<1x1x1024xf32>
    %48 = arith.mulf %47, %43 : vector<1x1x1024xf32>
    %49 = vector.broadcast %43 : vector<1x1x1024xf32> to vector<1x8x1024xf32>
    %50 = arith.mulf %39, %49 : vector<1x8x1024xf32>
    %51 = arith.subf %50, %32 : vector<1x8x1024xf32>
    %52 = math.absf %51 : vector<1x8x1024xf32>
    %53 = vector.broadcast %43 : vector<1x1x1024xf32> to vector<1x8x1024xf32>
    %54 = arith.mulf %52, %53 : vector<1x8x1024xf32>
    %cst_21 = arith.constant 0.000000e+00 : f32
    %55 = vector.broadcast %cst_21 : f32 to vector<1x8x1024xf32>
    %56 = arith.subf %55, %54 : vector<1x8x1024xf32>
    %57 = vector.shape_cast %56 : vector<1x8x1024xf32> to vector<8x1024xf32>
    %c0_22 = arith.constant 0 : index
    %c0_23 = arith.constant 0 : index
    %58 = vector.load %arg7[%c0_22, %c0_23] : memref<8x1024xf32, #tpu.memory_space<vmem>>, vector<8x1024xf32>
    tpu.vector_store %arg7[%c0_22, %c0_23], %57 {strides = array<i32>} : memref<8x1024xf32, #tpu.memory_space<vmem>>, vector<8x1024xf32>,
    %59 = vector.shape_cast %50 : vector<1x8x1024xf32> to vector<8x1024xf32>
    %60 = arith.truncf %59 : vector<8x1024xf32> to vector<8x1024xbf16>
    %c0_24 = arith.constant 0 : index
    %c0_25 = arith.constant 0 : index
    %61 = vector.load %arg8[%c0_24, %c0_25] : memref<8x1024xbf16, #tpu.memory_space<vmem>>, vector<8x1024xbf16>
    tpu.vector_store %arg8[%c0_24, %c0_25], %60 {strides = array<i32>} : memref<8x1024xbf16, #tpu.memory_space<vmem>>, vector<8x1024xbf16>,
    %62 = math.sqrt %22 : vector<1x1x1024xf32>
    %c0_i32_26 = arith.constant 0 : i32
    %63 = vector.broadcast %c0_i32_26 : i32 to vector<1x1x1024xi32>
    %64 = arith.cmpi sge, %16, %63 : vector<1x1x1024xi32>
    %65 = arith.extui %64 : vector<1x1x1024xi1> to vector<1x1x1024xi32>
    %66 = arith.sitofp %65 : vector<1x1x1024xi32> to vector<1x1x1024xf32>
    %cst_27 = arith.constant 0.000000e+00 : f32
    %67 = vector.broadcast %cst_27 : f32 to vector<1x1x1024xf32>
    %68 = arith.subf %67, %22 : vector<1x1x1024xf32>
    %cst_28 = arith.constant 5.000000e-01 : f32
    %69 = vector.broadcast %cst_28 : f32 to vector<1x1x1024xf32>
    %70 = arith.mulf %68, %69 : vector<1x1x1024xf32>
    %71 = math.exp %70 : vector<1x1x1024xf32>
    %72 = arith.mulf %71, %66 : vector<1x1x1024xf32>
    %cst_29 = arith.constant 9.99999996E-13 : f32
    %73 = vector.broadcast %cst_29 : f32 to vector<1x1x1024xf32>
    %74 = arith.addf %19, %73 : vector<1x1x1024xf32>
    %75 = math.log %74 : vector<1x1x1024xf32>
    %76 = arith.mulf %72, %75 : vector<1x1x1024xf32>
    %cst_30 = arith.constant 1.000000e+00 : f32
    %77 = vector.broadcast %cst_30 : f32 to vector<1x1x1024xf32>
    %78 = arith.subf %77, %72 : vector<1x1x1024xf32>
    %cst_31 = arith.constant 1.000000e+00 : f32
    %79 = vector.broadcast %cst_31 : f32 to vector<1x1x1024xf32>
    %80 = arith.subf %79, %19 : vector<1x1x1024xf32>
    %cst_32 = arith.constant 9.99999996E-13 : f32
    %81 = vector.broadcast %cst_32 : f32 to vector<1x1x1024xf32>
    %82 = arith.addf %80, %81 : vector<1x1x1024xf32>
    %83 = math.log %82 : vector<1x1x1024xf32>
    %84 = arith.mulf %78, %83 : vector<1x1x1024xf32>
    %85 = arith.addf %76, %84 : vector<1x1x1024xf32>
    %cst_33 = arith.constant 0.000000e+00 : f32
    %86 = vector.broadcast %cst_33 : f32 to vector<1x1x1024xf32>
    %87 = arith.subf %86, %85 : vector<1x1x1024xf32>
    %cst_34 = arith.constant 0.000000e+00 : f32
    %88 = vector.broadcast %cst_34 : f32 to vector<1x1x1024xf32>
    %89 = arith.cmpf ogt, %43, %88 : vector<1x1x1024xf32>
    %cst_35 = arith.constant 0xFF800000 : f32
    %90 = vector.broadcast %cst_35 : f32 to vector<1x1x1024xf32>
    %91 = arith.select %89, %87, %90 : vector<1x1x1024xi1>, vector<1x1x1024xf32>
    %92 = vector.shape_cast %91 : vector<1x1x1024xf32> to vector<1x1024xf32>
    %c0_36 = arith.constant 0 : index
    %c0_37 = arith.constant 0 : index
    %93 = vector.load %arg9[%c0_36, %c0_37] : memref<1x1024xf32, #tpu.memory_space<vmem>>, vector<1x1024xf32>
    tpu.vector_store %arg9[%c0_36, %c0_37], %92 {strides = array<i32>} : memref<1x1024xf32, #tpu.memory_space<vmem>>, vector<1x1024xf32>,
    %94 = vector.shape_cast %48 : vector<1x1x1024xf32> to vector<1x1x1x1024xf32>
    %cst_38 = arith.constant dense<0.000000e+00> : vector<1xf32>
    %95 = vector.multi_reduction <add>, %94, %cst_38 [1, 2, 3] : vector<1x1x1x1024xf32> to vector<1xf32>
    %96 = vector.shape_cast %95 : vector<1xf32> to vector<1x1x1x1xf32>
    %97 = vector.extract %96[0, 0, 0, 0] : f32 from vector<1x1x1x1xf32>
    %98 = vector.shape_cast %43 : vector<1x1x1024xf32> to vector<1x1x1x1024xf32>
    %cst_39 = arith.constant dense<0.000000e+00> : vector<1xf32>
    %99 = vector.multi_reduction <add>, %98, %cst_39 [1, 2, 3] : vector<1x1x1x1024xf32> to vector<1xf32>
    %100 = vector.shape_cast %99 : vector<1xf32> to vector<1x1x1x1xf32>
    %101 = vector.extract %100[0, 0, 0, 0] : f32 from vector<1x1x1x1xf32>
    %102 = arith.mulf %62, %66 : vector<1x1x1024xf32>
    %103 = vector.shape_cast %102 : vector<1x1x1024xf32> to vector<1x1x1x1024xf32>
    %cst_40 = arith.constant dense<0.000000e+00> : vector<1xf32>
    %104 = vector.multi_reduction <add>, %103, %cst_40 [1, 2, 3] : vector<1x1x1x1024xf32> to vector<1xf32>
    %105 = vector.shape_cast %104 : vector<1xf32> to vector<1x1x1x1xf32>
    %106 = vector.extract %105[0, 0, 0, 0] : f32 from vector<1x1x1x1xf32>
    %107 = vector.shape_cast %66 : vector<1x1x1024xf32> to vector<1x1x1x1024xf32>
    %cst_41 = arith.constant dense<0.000000e+00> : vector<1xf32>
    %108 = vector.multi_reduction <add>, %107, %cst_41 [1, 2, 3] : vector<1x1x1x1024xf32> to vector<1xf32>
    %109 = vector.shape_cast %108 : vector<1xf32> to vector<1x1x1x1xf32>
    %110 = vector.extract %109[0, 0, 0, 0] : f32 from vector<1x1x1x1xf32>
    %111 = arith.mulf %87, %43 : vector<1x1x1024xf32>
    %112 = vector.shape_cast %111 : vector<1x1x1024xf32> to vector<1x1x1x1024xf32>
    %cst_42 = arith.constant dense<0.000000e+00> : vector<1xf32>
    %113 = vector.multi_reduction <add>, %112, %cst_42 [1, 2, 3] : vector<1x1x1x1024xf32> to vector<1xf32>
    %114 = vector.shape_cast %113 : vector<1xf32> to vector<1x1x1x1xf32>
    %115 = vector.extract %114[0, 0, 0, 0] : f32 from vector<1x1x1x1xf32>
    %116 = tpu.iota {dimensions = array<i32: 2>} : vector<1x1x8x128xi32>
    %c0_i32_43 = arith.constant 0 : i32
    %117 = vector.broadcast %c0_i32_43 : i32 to vector<1x1x8x128xi32>
    %118 = arith.cmpi eq, %116, %117 : vector<1x1x8x128xi32>
    %cst_44 = arith.constant 0.000000e+00 : f32
    %119 = vector.broadcast %97 : f32 to vector<1x1x8x128xf32>
    %120 = vector.broadcast %cst_44 : f32 to vector<1x1x8x128xf32>
    %121 = arith.select %118, %119, %120 : vector<1x1x8x128xi1>, vector<1x1x8x128xf32>
    %c1_i32 = arith.constant 1 : i32
    %122 = vector.broadcast %c1_i32 : i32 to vector<1x1x8x128xi32>
    %123 = arith.cmpi eq, %116, %122 : vector<1x1x8x128xi32>
    %cst_45 = arith.constant 0.000000e+00 : f32
    %124 = vector.broadcast %101 : f32 to vector<1x1x8x128xf32>
    %125 = vector.broadcast %cst_45 : f32 to vector<1x1x8x128xf32>
    %126 = arith.select %123, %124, %125 : vector<1x1x8x128xi1>, vector<1x1x8x128xf32>
    %127 = arith.addf %121, %126 : vector<1x1x8x128xf32>
    %c2_i32 = arith.constant 2 : i32
    %128 = vector.broadcast %c2_i32 : i32 to vector<1x1x8x128xi32>
    %129 = arith.cmpi eq, %116, %128 : vector<1x1x8x128xi32>
    %cst_46 = arith.constant 0.000000e+00 : f32
    %130 = vector.broadcast %106 : f32 to vector<1x1x8x128xf32>
    %131 = vector.broadcast %cst_46 : f32 to vector<1x1x8x128xf32>
    %132 = arith.select %129, %130, %131 : vector<1x1x8x128xi1>, vector<1x1x8x128xf32>
    %133 = arith.addf %127, %132 : vector<1x1x8x128xf32>
    %c3_i32 = arith.constant 3 : i32
    %134 = vector.broadcast %c3_i32 : i32 to vector<1x1x8x128xi32>
    %135 = arith.cmpi eq, %116, %134 : vector<1x1x8x128xi32>
    %cst_47 = arith.constant 0.000000e+00 : f32
    %136 = vector.broadcast %110 : f32 to vector<1x1x8x128xf32>
    %137 = vector.broadcast %cst_47 : f32 to vector<1x1x8x128xf32>
    %138 = arith.select %135, %136, %137 : vector<1x1x8x128xi1>, vector<1x1x8x128xf32>
    %139 = arith.addf %133, %138 : vector<1x1x8x128xf32>
    %c4_i32 = arith.constant 4 : i32
    %140 = vector.broadcast %c4_i32 : i32 to vector<1x1x8x128xi32>
    %141 = arith.cmpi eq, %116, %140 : vector<1x1x8x128xi32>
    %cst_48 = arith.constant 0.000000e+00 : f32
    %142 = vector.broadcast %115 : f32 to vector<1x1x8x128xf32>
    %143 = vector.broadcast %cst_48 : f32 to vector<1x1x8x128xf32>
    %144 = arith.select %141, %142, %143 : vector<1x1x8x128xi1>, vector<1x1x8x128xf32>
    %145 = arith.addf %139, %144 : vector<1x1x8x128xf32>
    %c0_49 = arith.constant 0 : index
    %c0_50 = arith.constant 0 : index
    %c0_51 = arith.constant 0 : index
    %c0_52 = arith.constant 0 : index
    %146 = vector.load %arg10[%c0_49, %c0_50, %c0_51, %c0_52] : memref<1x1x8x128xf32, #tpu.memory_space<vmem>>, vector<1x1x8x128xf32>
    tpu.vector_store %arg10[%c0_49, %c0_50, %c0_51, %c0_52], %145 {strides = array<i32>} : memref<1x1x8x128xf32, #tpu.memory_space<vmem>>, vector<1x1x8x128xf32>,
    return
  }
  func.func @transform_0(%arg0: i32, %arg1: i32) -> (i32, i32, i32) {
    %c0_i32 = arith.constant 0 : i32
    %c0_i32_0 = arith.constant 0 : i32
    return %arg0, %c0_i32, %arg1 : i32, i32, i32
  }
  func.func @transform_1(%arg0: i32, %arg1: i32) -> (i32, i32, i32) {
    %c0_i32 = arith.constant 0 : i32
    %c0_i32_0 = arith.constant 0 : i32
    return %arg0, %c0_i32, %arg1 : i32, i32, i32
  }
  func.func @transform_2(%arg0: i32, %arg1: i32) -> (i32, i32, i32) {
    %c0_i32 = arith.constant 0 : i32
    %c0_i32_0 = arith.constant 0 : i32
    return %arg0, %c0_i32, %arg1 : i32, i32, i32
  }
  func.func @transform_3(%arg0: i32, %arg1: i32) -> (i32, i32, i32) {
    %c0_i32 = arith.constant 0 : i32
    %c0_i32_0 = arith.constant 0 : i32
    return %arg0, %c0_i32, %arg1 : i32, i32, i32
  }
  func.func @transform_4(%arg0: i32, %arg1: i32) -> (i32, i32, i32) {
    %c0_i32 = arith.constant 0 : i32
    %c0_i32_0 = arith.constant 0 : i32
    return %arg0, %c0_i32, %arg1 : i32, i32, i32
  }
  func.func @transform_5(%arg0: i32, %arg1: i32) -> (i32, i32) {
    %c1_i32 = arith.constant 1 : i32
    %0 = arith.muli %arg0, %c1_i32 : i32
    %1 = arith.addi %0, %arg1 : i32
    %c0_i32 = arith.constant 0 : i32
    %c0_i32_0 = arith.constant 0 : i32
    return %c0_i32, %1 : i32, i32
  }
  func.func @transform_6(%arg0: i32, %arg1: i32) -> (i32, i32) {
    %c1_i32 = arith.constant 1 : i32
    %0 = arith.muli %arg0, %c1_i32 : i32
    %1 = arith.addi %0, %arg1 : i32
    %c0_i32 = arith.constant 0 : i32
    %c0_i32_0 = arith.constant 0 : i32
    return %c0_i32, %1 : i32, i32
  }
  func.func @transform_7(%arg0: i32, %arg1: i32) -> (i32, i32) {
    %c1_i32 = arith.constant 1 : i32
    %0 = arith.muli %arg0, %c1_i32 : i32
    %1 = arith.addi %0, %arg1 : i32
    %c0_i32 = arith.constant 0 : i32
    %c0_i32_0 = arith.constant 0 : i32
    return %c0_i32, %1 : i32, i32
  }
  func.func @transform_8(%arg0: i32, %arg1: i32) -> (i32, i32, i32, i32) {
    %c0_i32 = arith.constant 0 : i32
    %c0_i32_0 = arith.constant 0 : i32
    %c0_i32_1 = arith.constant 0 : i32
    return %arg0, %arg1, %c0_i32, %c0_i32_0 : i32, i32, i32, i32
  }
}

</mosaic_0001>

<llo_original>
// kernel: _panoptic_forward.1
$region0: #{_panoptic_forward.1}
  #allocation0 [shape = 'u32[]', space=smem, size = 0x4, offset = 0x4, fixed_abs, tag = 'smem constant byte address 0x4 - core index']
  #allocation1 [shape = 'u32[72,128]{1,0:T(1,128)}', space=vmem, size = 0x9000, scoped, tag = 'internal scratch']
  %s0 = inlined_call_operand.vmem [shape: f32[2,8,1024], index: 0, kind: input, shape index: {}]
  %s1 = inlined_call_operand.vmem [shape: s32[2,1,1024], index: 1, kind: input, shape index: {}]
  %s2 = inlined_call_operand.vmem [shape: s32[2,1,1024], index: 2, kind: input, shape index: {}]
  %s3 = inlined_call_operand.vmem [shape: f32[2,1,1024], index: 3, kind: input, shape index: {}]
  %s4 = inlined_call_operand.vmem [shape: f32[2,1,1024], index: 4, kind: input, shape index: {}]
  %s5 = inlined_call_operand.vmem [shape: f32[8,2048], index: 5, kind: output, shape index: {0}]
  %s6 = inlined_call_operand.vmem [shape: bf16[8,2048], index: 6, kind: output, shape index: {1}]
  %s7 = inlined_call_operand.vmem [shape: f32[1,2048], index: 7, kind: output, shape index: {2}]
  %s8 = inlined_call_operand.vmem [shape: f32[2,1,8,128], index: 8, kind: output, shape index: {3}]
  %9 = xla_tuple %s5, %s6, %s7, %s8
  %s10 = sld [smem:[#allocation0]]
  $region77: #{_panoptic_forward.1} parent=0
    _
  %s12 = ssub.s32 1, %s10
  %s13 = scalar_select 0, %s12, %s10
  loop: start=0, step=1, limit=4
  $region2: #{_panoptic_forward.1} parent=0 // loop_pre_header
    _
  $region3: #{_panoptic_forward.1} parent=0 // loop_header
    %s15 = sphi 0, %s19
    %p16 = scmp.ge.s32.totalorder %s15, 4
    %s22 = sphi 0, %s34
    %s23 = sphi 0, %s30
    %s24 = sphi 0, %s22
    %s25 = sphi 0, %s23
    %s26 = sphi 0, %s24
    %s27 = sphi 0, %s25
    %s39 = sphi 0, %s41
    %s42 = sphi 0, %s39
    %s43 = sphi 0, %s42
    %s59 = sphi 0, %s43
    %s67 = sphi 0, %s69
    %s70 = sphi 0, %s67
    %s71 = sphi 0, %s70
    %s87 = sphi 0, %s71
    %s95 = sphi 0, %s97
    %s98 = sphi 0, %s95
    %s99 = sphi 0, %s98
    %s115 = sphi 0, %s99
    %s123 = sphi 0, %s125
    %s126 = sphi 0, %s123
    %s127 = sphi 0, %s126
    %s143 = sphi 0, %s127
    %s151 = sphi 0, %s153
    %s154 = sphi 0, %s151
    %s155 = sphi 0, %s154
    %s171 = sphi 0, %s155
    %s179 = sphi 0, %s181
    %s182 = sphi 0, %s179
    %s183 = sphi 0, %s182
    %s199 = sphi 0, %s183
    %s207 = sphi 0, %s209
    %s210 = sphi 0, %s207
    %s211 = sphi 0, %s210
    %s227 = sphi 0, %s211
    %s235 = sphi 0, %s237
    %s238 = sphi 0, %s235
    %s239 = sphi 0, %s238
    %s255 = sphi 0, %s239
    %s263 = sphi 0, %s265
    %s266 = sphi 0, %s263
    %s267 = sphi 0, %s266
    %s283 = sphi 0, %s267
  $region4: #{_panoptic_forward.1} parent=0 // loop_header_branch
    %18 = sbr.rel (%p16) target = $region8
  $region5: #{_panoptic_forward.1} parent=0 // loop_body
    %s20 = ssub.s32 %s15, 1
    %s21 = ssub.s32 %s15, 2
    %s28 = sadd.s32 1, %s23
    %p29 = scmp.ge.s32.totalorder %s28, 1
    %s30 = scalar_select %p29, 0, %s28
    %s31 = sadd.s32 1, %s22
    %s32 = scalar_select %p29, %s31, %s22
    %p33 = scmp.ge.s32.totalorder %s32, 2
    %s34 = scalar_select %p33, 0, %s32
    %s35 = ssub.s32 %s22, %s34
    %s36 = ssub.s32 %s23, %s30
    %s37 = sor.u32 %s35, %s36
    %p38 = scmp.eq.s32.totalorder %s37, 0
    %s40 = sadd.s32 %s39, 1
    %s41 = scalar_select %p38, %s39, %s40
    %p44 = pneg %p38
    %p45 = scmp.eq.s32.totalorder %s15, 1
    %p46 = por %p44, %p45
    %p47 = scmp.ne.s32.totalorder %s39, %s42
    %p48 = scmp.eq.s32.totalorder %s15, 0
    %p49 = por %p47, %p48
    %p50 = scmp.ne.s32.totalorder %s39, %s42
    %p51 = scmp.eq.s32.totalorder %s20, 1
    %p52 = por %p50, %p51
    %p53 = scmp.ne.s32.totalorder %s42, %s43
    %p54 = scmp.eq.s32.totalorder %s20, 0
    %p55 = por %p53, %p54
    %p56 = scmp.ne.s32.totalorder %s42, %s43
    %p57 = scmp.eq.s32.totalorder %s21, 1
    %p58 = por %p56, %p57
    %p60 = scmp.ne.s32.totalorder %s43, %s59
    %p61 = scmp.eq.s32.totalorder %s21, 0
    %p62 = por %p60, %p61
    %s63 = ssub.s32 %s22, %s34
    %s64 = ssub.s32 %s23, %s30
    %s65 = sor.u32 %s63, %s64
    %p66 = scmp.eq.s32.totalorder %s65, 0
    %s68 = sadd.s32 %s67, 1
    %s69 = scalar_select %p66, %s67, %s68
    %p72 = pneg %p66
    %p73 = scmp.eq.s32.totalorder %s15, 1
    %p74 = por %p72, %p73
    %p75 = scmp.ne.s32.totalorder %s67, %s70
    %p76 = scmp.eq.s32.totalorder %s15, 0
    %p77 = por %p75, %p76
    %p78 = scmp.ne.s32.totalorder %s67, %s70
    %p79 = scmp.eq.s32.totalorder %s20, 1
    %p80 = por %p78, %p79
    %p81 = scmp.ne.s32.totalorder %s70, %s71
    %p82 = scmp.eq.s32.totalorder %s20, 0
    %p83 = por %p81, %p82
    %p84 = scmp.ne.s32.totalorder %s70, %s71
    %p85 = scmp.eq.s32.totalorder %s21, 1
    %p86 = por %p84, %p85
    %p88 = scmp.ne.s32.totalorder %s71, %s87
    %p89 = scmp.eq.s32.totalorder %s21, 0
    %p90 = por %p88, %p89
    %s91 = ssub.s32 %s22, %s34
    %s92 = ssub.s32 %s23, %s30
    %s93 = sor.u32 %s91, %s92
    %p94 = scmp.eq.s32.totalorder %s93, 0
    %s96 = sadd.s32 %s95, 1
    %s97 = scalar_select %p94, %s95, %s96
    %p100 = pneg %p94
    %p101 = scmp.eq.s32.totalorder %s15, 1
    %p102 = por %p100, %p101
    %p103 = scmp.ne.s32.totalorder %s95, %s98
    %p104 = scmp.eq.s32.totalorder %s15, 0
    %p105 = por %p103, %p104
    %p106 = scmp.ne.s32.totalorder %s95, %s98
    %p107 = scmp.eq.s32.totalorder %s20, 1
    %p108 = por %p106, %p107
    %p109 = scmp.ne.s32.totalorder %s98, %s99
    %p110 = scmp.eq.s32.totalorder %s20, 0
    %p111 = por %p109, %p110
    %p112 = scmp.ne.s32.totalorder %s98, %s99
    %p113 = scmp.eq.s32.totalorder %s21, 1
    %p114 = por %p112, %p113
    %p116 = scmp.ne.s32.totalorder %s99, %s115
    %p117 = scmp.eq.s32.totalorder %s21, 0
    %p118 = por %p116, %p117
    %s119 = ssub.s32 %s22, %s34
    %s120 = ssub.s32 %s23, %s30
    %s121 = sor.u32 %s119, %s120
    %p122 = scmp.eq.s32.totalorder %s121, 0
    %s124 = sadd.s32 %s123, 1
    %s125 = scalar_select %p122, %s123, %s124
    %p128 = pneg %p122
    %p129 = scmp.eq.s32.totalorder %s15, 1
    %p130 = por %p128, %p129
    %p131 = scmp.ne.s32.totalorder %s123, %s126
    %p132 = scmp.eq.s32.totalorder %s15, 0
    %p133 = por %p131, %p132
    %p134 = scmp.ne.s32.totalorder %s123, %s126
    %p135 = scmp.eq.s32.totalorder %s20, 1
    %p136 = por %p134, %p135
    %p137 = scmp.ne.s32.totalorder %s126, %s127
    %p138 = scmp.eq.s32.totalorder %s20, 0
    %p139 = por %p137, %p138
    %p140 = scmp.ne.s32.totalorder %s126, %s127
    %p141 = scmp.eq.s32.totalorder %s21, 1
    %p142 = por %p140, %p141
    %p144 = scmp.ne.s32.totalorder %s127, %s143
    %p145 = scmp.eq.s32.totalorder %s21, 0
    %p146 = por %p144, %p145
    %s147 = ssub.s32 %s22, %s34
    %s148 = ssub.s32 %s23, %s30
    %s149 = sor.u32 %s147, %s148
    %p150 = scmp.eq.s32.totalorder %s149, 0
    %s152 = sadd.s32 %s151, 1
    %s153 = scalar_select %p150, %s151, %s152
    %p156 = pneg %p150
    %p157 = scmp.eq.s32.totalorder %s15, 1
    %p158 = por %p156, %p157
    %p159 = scmp.ne.s32.totalorder %s151, %s154
    %p160 = scmp.eq.s32.totalorder %s15, 0
    %p161 = por %p159, %p160
    %p162 = scmp.ne.s32.totalorder %s151, %s154
    %p163 = scmp.eq.s32.totalorder %s20, 1
    %p164 = por %p162, %p163
    %p165 = scmp.ne.s32.totalorder %s154, %s155
    %p166 = scmp.eq.s32.totalorder %s20, 0
    %p167 = por %p165, %p166
    %p168 = scmp.ne.s32.totalorder %s154, %s155
    %p169 = scmp.eq.s32.totalorder %s21, 1
    %p170 = por %p168, %p169
    %p172 = scmp.ne.s32.totalorder %s155, %s171
    %p173 = scmp.eq.s32.totalorder %s21, 0
    %p174 = por %p172, %p173
    %s175 = sadd.s32 %s22, %s23
    %s176 = sadd.s32 %s34, %s30
    %s177 = ssub.s32 %s175, %s176
    %p178 = scmp.eq.s32.totalorder %s177, 0
    %s180 = sadd.s32 %s179, 1
    %s181 = scalar_select %p178, %s179, %s180
    %p184 = pneg %p178
    %p185 = scmp.eq.s32.totalorder %s15, 1
    %p186 = por %p184, %p185
    %p187 = scmp.ne.s32.totalorder %s179, %s182
    %p188 = scmp.eq.s32.totalorder %s15, 0
    %p189 = por %p187, %p188
    %p190 = scmp.ne.s32.totalorder %s179, %s182
    %p191 = scmp.eq.s32.totalorder %s20, 1
    %p192 = por %p190, %p191
    %p193 = scmp.ne.s32.totalorder %s182, %s183
    %p194 = scmp.eq.s32.totalorder %s20, 0
    %p195 = por %p193, %p194
    %p196 = scmp.ne.s32.totalorder %s182, %s183
    %p197 = scmp.eq.s32.totalorder %s21, 1
    %p198 = por %p196, %p197
    %p200 = scmp.ne.s32.totalorder %s183, %s199
    %p201 = scmp.eq.s32.totalorder %s21, 0
    %p202 = por %p200, %p201
    %s203 = sadd.s32 %s22, %s23
    %s204 = sadd.s32 %s34, %s30
    %s205 = ssub.s32 %s203, %s204
    %p206 = scmp.eq.s32.totalorder %s205, 0
    %s208 = sadd.s32 %s207, 1
    %s209 = scalar_select %p206, %s207, %s208
    %p212 = pneg %p206
    %p213 = scmp.eq.s32.totalorder %s15, 1
    %p214 = por %p212, %p213
    %p215 = scmp.ne.s32.totalorder %s207, %s210
    %p216 = scmp.eq.s32.totalorder %s15, 0
    %p217 = por %p215, %p216
    %p218 = scmp.ne.s32.totalorder %s207, %s210
    %p219 = scmp.eq.s32.totalorder %s20, 1
    %p220 = por %p218, %p219
    %p221 = scmp.ne.s32.totalorder %s210, %s211
    %p222 = scmp.eq.s32.totalorder %s20, 0
    %p223 = por %p221, %p222
    %p224 = scmp.ne.s32.totalorder %s210, %s211
    %p225 = scmp.eq.s32.totalorder %s21, 1
    %p226 = por %p224, %p225
    %p228 = scmp.ne.s32.totalorder %s211, %s227
    %p229 = scmp.eq.s32.totalorder %s21, 0
    %p230 = por %p228, %p229
    %s231 = sadd.s32 %s22, %s23
    %s232 = sadd.s32 %s34, %s30
    %s233 = ssub.s32 %s231, %s232
    %p234 = scmp.eq.s32.totalorder %s233, 0
    %s236 = sadd.s32 %s235, 1
    %s237 = scalar_select %p234, %s235, %s236
    %p240 = pneg %p234
    %p241 = scmp.eq.s32.totalorder %s15, 1
    %p242 = por %p240, %p241
    %p243 = scmp.ne.s32.totalorder %s235, %s238
    %p244 = scmp.eq.s32.totalorder %s15, 0
    %p245 = por %p243, %p244
    %p246 = scmp.ne.s32.totalorder %s235, %s238
    %p247 = scmp.eq.s32.totalorder %s20, 1
    %p248 = por %p246, %p247
    %p249 = scmp.ne.s32.totalorder %s238, %s239
    %p250 = scmp.eq.s32.totalorder %s20, 0
    %p251 = por %p249, %p250
    %p252 = scmp.ne.s32.totalorder %s238, %s239
    %p253 = scmp.eq.s32.totalorder %s21, 1
    %p254 = por %p252, %p253
    %p256 = scmp.ne.s32.totalorder %s239, %s255
    %p257 = scmp.eq.s32.totalorder %s21, 0
    %p258 = por %p256, %p257
    %s259 = ssub.s32 %s22, %s34
    %s260 = ssub.s32 %s23, %s30
    %s261 = sor.u32 %s259, %s260
    %p262 = scmp.eq.s32.totalorder %s261, 0
    %s264 = sadd.s32 %s263, 1
    %s265 = scalar_select %p262, %s263, %s264
    %p268 = pneg %p262
    %p269 = scmp.eq.s32.totalorder %s15, 1
    %p270 = por %p268, %p269
    %p271 = scmp.ne.s32.totalorder %s263, %s266
    %p272 = scmp.eq.s32.totalorder %s15, 0
    %p273 = por %p271, %p272
    %p274 = scmp.ne.s32.totalorder %s263, %s266
    %p275 = scmp.eq.s32.totalorder %s20, 1
    %p276 = por %p274, %p275
    %p277 = scmp.ne.s32.totalorder %s266, %s267
    %p278 = scmp.eq.s32.totalorder %s20, 0
    %p279 = por %p277, %p278
    %p280 = scmp.ne.s32.totalorder %s266, %s267
    %p281 = scmp.eq.s32.totalorder %s21, 1
    %p282 = por %p280, %p281
    %p284 = scmp.ne.s32.totalorder %s267, %s283
    %p285 = scmp.eq.s32.totalorder %s21, 0
    %p286 = por %p284, %p285
    %p287 = scmp.le.s32.totalorder 1, %s15
    %p288 = scmp.lt.s32.totalorder %s15, 3
    %p289 = pnand %p287, %p288
    %p290 = pneg %p289
    // Predicated region
    $region9: #{_panoptic_forward.1} parent=5 // pred_check
      _
    $region10: #{_panoptic_forward.1} parent=5 // pred_check_branch
      %292 = sbr.rel (%p289) target = $region12
    $region11: #{_panoptic_forward.1} parent=5 // pred_region
      %s293 = ssub.s32 %s15, 1
    $region12: #{_panoptic_forward.1} parent=5 // pred_fallthru
      _
    %p294 = scmp.lt.s32.totalorder %s15, 2
    // Predicated region
    $region13: #{_panoptic_forward.1} parent=5 // pred_check
      %p295 = pneg %p294
    $region14: #{_panoptic_forward.1} parent=5 // pred_check_branch
      %297 = sbr.rel (%p295) target = $region16
    $region15: #{_panoptic_forward.1} parent=5 // pred_region
      // Predicated region
      $region17: #{_panoptic_forward.1} parent=15 // pred_check
        %p298 = pneg %p49
      $region18: #{_panoptic_forward.1} parent=15 // pred_check_branch
        %300 = sbr.rel (%p298) target = $region20
      $region19: #{_panoptic_forward.1} parent=15 // pred_region
        %s301 = smul.u32 8, %s23
        %p302 = scmp.lt.s32.totalorder %s22, 1
        %s303 = scalar_select %p302, %s22, 1
        %p304 = scmp.lt.s32.totalorder %s301, 7
        %s305 = scalar_select %p304, %s301, 7
        %s306 = smul.addr %s303, 8
        %s307 = sadd.s32 %s305, %s306
        %s308 = smul.addr %s307, 8
        %s309 = scalar_lea.vmem %s0, %s308
        %s310 = smul.u32 8, %s23
      $region20: #{_panoptic_forward.1} parent=15 // pred_fallthru
        _
      // Predicated region
      $region21: #{_panoptic_forward.1} parent=15 // pred_check
        %p311 = pneg %p77
      $region22: #{_panoptic_forward.1} parent=15 // pred_check_branch
        %313 = sbr.rel (%p311) target = $region24
      $region23: #{_panoptic_forward.1} parent=15 // pred_region
        %s314 = smul.u32 8, %s23
        %p315 = scmp.lt.s32.totalorder %s22, 1
        %s316 = scalar_select %p315, %s22, 1
        %p317 = scmp.lt.s32.totalorder %s314, 7
        %s318 = scalar_select %p317, %s314, 7
        %s319 = smul.addr %s316, 8
        %s320 = sadd.s32 %s318, %s319
        %s321 = scalar_lea.vmem %s1, %s320
        %s322 = smul.u32 8, %s23
      $region24: #{_panoptic_forward.1} parent=15 // pred_fallthru
        _
      // Predicated region
      $region25: #{_panoptic_forward.1} parent=15 // pred_check
        %p323 = pneg %p105
      $region26: #{_panoptic_forward.1} parent=15 // pred_check_branch
        %325 = sbr.rel (%p323) target = $region28
      $region27: #{_panoptic_forward.1} parent=15 // pred_region
        %s326 = smul.u32 8, %s23
        %p327 = scmp.lt.s32.totalorder %s22, 1
        %s328 = scalar_select %p327, %s22, 1
        %p329 = scmp.lt.s32.totalorder %s326, 7
        %s330 = scalar_select %p329, %s326, 7
        %s331 = smul.addr %s328, 8
        %s332 = sadd.s32 %s330, %s331
        %s333 = scalar_lea.vmem %s2, %s332
        %s334 = smul.u32 8, %s23
      $region28: #{_panoptic_forward.1} parent=15 // pred_fallthru
        _
      // Predicated region
      $region29: #{_panoptic_forward.1} parent=15 // pred_check
        %p335 = pneg %p133
      $region30: #{_panoptic_forward.1} parent=15 // pred_check_branch
        %337 = sbr.rel (%p335) target = $region32
      $region31: #{_panoptic_forward.1} parent=15 // pred_region
        %s338 = smul.u32 8, %s23
        %p339 = scmp.lt.s32.totalorder %s22, 1
        %s340 = scalar_select %p339, %s22, 1
        %p341 = scmp.lt.s32.totalorder %s338, 7
        %s342 = scalar_select %p341, %s338, 7
        %s343 = smul.addr %s340, 8
        %s344 = sadd.s32 %s342, %s343
        %s345 = scalar_lea.vmem %s3, %s344
        %s346 = smul.u32 8, %s23
      $region32: #{_panoptic_forward.1} parent=15 // pred_fallthru
        _
      // Predicated region
      $region33: #{_panoptic_forward.1} parent=15 // pred_check
        %p347 = pneg %p161
      $region34: #{_panoptic_forward.1} parent=15 // pred_check_branch
        %349 = sbr.rel (%p347) target = $region36
      $region35: #{_panoptic_forward.1} parent=15 // pred_region
        %s350 = smul.u32 8, %s23
        %p351 = scmp.lt.s32.totalorder %s22, 1
        %s352 = scalar_select %p351, %s22, 1
        %p353 = scmp.lt.s32.totalorder %s350, 7
        %s354 = scalar_select %p353, %s350, 7
        %s355 = smul.addr %s352, 8
        %s356 = sadd.s32 %s354, %s355
        %s357 = scalar_lea.vmem %s4, %s356
        %s358 = smul.u32 8, %s23
      $region36: #{_panoptic_forward.1} parent=15 // pred_fallthru
        _
    $region16: #{_panoptic_forward.1} parent=5 // pred_fallthru
      _
    %p359 = scmp.le.s32.totalorder 1, %s15
    %p360 = scmp.lt.s32.totalorder %s15, 3
    %p361 = pnand %p359, %p360
    %p362 = pneg %p361
    // Predicated region
    $region37: #{_panoptic_forward.1} parent=5 // pred_check
      _
    $region38: #{_panoptic_forward.1} parent=5 // pred_check_branch
      %364 = sbr.rel (%p361) target = $region40
    $region39: #{_panoptic_forward.1} parent=5 // pred_region
      %s365 = ssub.s32 %s15, 1
      %s366 = smul.u32 8, %s25
      %p367 = scmp.lt.s32.totalorder %s24, 1
      %s368 = scalar_select %p367, %s24, 1
      %p369 = scmp.lt.s32.totalorder %s366, 7
      %s370 = scalar_select %p369, %s366, 7
      %s371 = smul.addr %s368, 8
      %s372 = sadd.s32 %s370, %s371
      %s373 = smul.addr %s372, 8
      %s374 = scalar_lea.vmem %s0, %s373
      %p375 = pneg %p55
      %p376 = pneg %p52
      %s377 = smul.u32 8, %s25
      %p378 = scmp.lt.s32.totalorder %s24, 1
      %s379 = scalar_select %p378, %s24, 1
      %p380 = scmp.lt.s32.totalorder %s377, 7
      %s381 = scalar_select %p380, %s377, 7
      %s382 = smul.addr %s379, 8
      %s383 = sadd.s32 %s381, %s382
      %s384 = scalar_lea.vmem %s1, %s383
      %p385 = pneg %p83
      %p386 = pneg %p80
      %s387 = smul.u32 8, %s25
      %p388 = scmp.lt.s32.totalorder %s24, 1
      %s389 = scalar_select %p388, %s24, 1
      %p390 = scmp.lt.s32.totalorder %s387, 7
      %s391 = scalar_select %p390, %s387, 7
      %s392 = smul.addr %s389, 8
      %s393 = sadd.s32 %s391, %s392
      %s394 = scalar_lea.vmem %s2, %s393
      %p395 = pneg %p111
      %p396 = pneg %p108
      %s397 = smul.u32 8, %s25
      %p398 = scmp.lt.s32.totalorder %s24, 1
      %s399 = scalar_select %p398, %s24, 1
      %p400 = scmp.lt.s32.totalorder %s397, 7
      %s401 = scalar_select %p400, %s397, 7
      %s402 = smul.addr %s399, 8
      %s403 = sadd.s32 %s401, %s402
      %s404 = scalar_lea.vmem %s3, %s403
      %p405 = pneg %p139
      %p406 = pneg %p136
      %s407 = smul.u32 8, %s25
      %p408 = scmp.lt.s32.totalorder %s24, 1
      %s409 = scalar_select %p408, %s24, 1
      %p410 = scmp.lt.s32.totalorder %s407, 7
      %s411 = scalar_select %p410, %s407, 7
      %s412 = smul.addr %s409, 8
      %s413 = sadd.s32 %s411, %s412
      %s414 = scalar_lea.vmem %s4, %s413
      %p415 = pneg %p167
      %p416 = pneg %p164
      %p417 = pneg %p195
      %p418 = pneg %p192
      %s419 = sadd.s32 %s24, %s25
      %s420 = smul.u32 8, %s419
      %p421 = scmp.lt.s32.totalorder %s420, 15
      %s422 = scalar_select %p421, %s420, 15
      %s423 = smul.addr %s422, 8
      %s424 = scalar_lea.vmem %s5, %s423
      %p425 = pneg %p223
      %p426 = pneg %p220
      %s427 = sadd.s32 %s24, %s25
      %s428 = smul.u32 8, %s427
      %p429 = scmp.lt.s32.totalorder %s428, 15
      %s430 = scalar_select %p429, %s428, 15
      %s431 = smul.addr %s430, 4
      %s432 = scalar_lea.vmem %s6, %s431
      %p433 = pneg %p251
      %p434 = pneg %p248
      %s435 = sadd.s32 %s24, %s25
      %s436 = smul.u32 8, %s435
      %p437 = scmp.lt.s32.totalorder %s436, 15
      %s438 = scalar_select %p437, %s436, 15
      %s439 = scalar_lea.vmem %s7, %s438
      %p440 = pneg %p279
      %p441 = pneg %p276
      %p442 = scmp.lt.s32.totalorder %s24, 1
      %s443 = scalar_select %p442, %s24, 1
      %p444 = scmp.lt.s32.totalorder %s25, 0
      %s445 = scalar_select %p444, %s25, 0
      %s446 = sadd.s32 %s445, %s443
      %s447 = smul.addr %s446, 8
      %s448 = scalar_lea.vmem %s8, %s447
      %s449 = smul.u32 8, %s25
      %p450 = scmp.lt.s32.totalorder %s24, 1
      %s451 = scalar_select %p450, %s24, 1
      %p452 = scmp.lt.s32.totalorder %s449, 7
      %s453 = scalar_select %p452, %s449, 7
      %s454 = smul.addr %s451, 8
      %s455 = sadd.s32 %s453, %s454
      %s456 = smul.addr %s455, 8
      %s457 = scalar_lea.vmem %s0, %s456
      %s458 = smul.u32 8, %s25
      %s459 = smul.u32 8, %s25
      %p460 = scmp.lt.s32.totalorder %s24, 1
      %s461 = scalar_select %p460, %s24, 1
      %p462 = scmp.lt.s32.totalorder %s459, 7
      %s463 = scalar_select %p462, %s459, 7
      %s464 = smul.addr %s461, 8
      %s465 = sadd.s32 %s463, %s464
      %s466 = scalar_lea.vmem %s1, %s465
      %s467 = smul.u32 8, %s25
      %s468 = smul.u32 8, %s25
      %p469 = scmp.lt.s32.totalorder %s24, 1
      %s470 = scalar_select %p469, %s24, 1
      %p471 = scmp.lt.s32.totalorder %s468, 7
      %s472 = scalar_select %p471, %s468, 7
      %s473 = smul.addr %s470, 8
      %s474 = sadd.s32 %s472, %s473
      %s475 = scalar_lea.vmem %s2, %s474
      %s476 = smul.u32 8, %s25
      %s477 = smul.u32 8, %s25
      %p478 = scmp.lt.s32.totalorder %s24, 1
      %s479 = scalar_select %p478, %s24, 1
      %p480 = scmp.lt.s32.totalorder %s477, 7
      %s481 = scalar_select %p480, %s477, 7
      %s482 = smul.addr %s479, 8
      %s483 = sadd.s32 %s481, %s482
      %s484 = scalar_lea.vmem %s3, %s483
      %s485 = smul.u32 8, %s25
      %s486 = smul.u32 8, %s25
      %p487 = scmp.lt.s32.totalorder %s24, 1
      %s488 = scalar_select %p487, %s24, 1
      %p489 = scmp.lt.s32.totalorder %s486, 7
      %s490 = scalar_select %p489, %s486, 7
      %s491 = smul.addr %s488, 8
      %s492 = sadd.s32 %s490, %s491
      %s493 = scalar_lea.vmem %s4, %s492
      %s494 = smul.u32 8, %s25
      %s495 = sadd.s32 %s24, %s25
      %s496 = smul.u32 8, %s495
      %p497 = scmp.lt.s32.totalorder %s496, 15
      %s498 = scalar_select %p497, %s496, 15
      %s499 = smul.addr %s498, 8
      %s500 = scalar_lea.vmem %s5, %s499
      %s501 = sadd.s32 %s24, %s25
      %s502 = smul.u32 8, %s501
      %s503 = sadd.s32 %s24, %s25
      %s504 = smul.u32 8, %s503
      %p505 = scmp.lt.s32.totalorder %s504, 15
      %s506 = scalar_select %p505, %s504, 15
      %s507 = smul.addr %s506, 4
      %s508 = scalar_lea.vmem %s6, %s507
      %s509 = sadd.s32 %s24, %s25
      %s510 = smul.u32 8, %s509
      %s511 = sadd.s32 %s24, %s25
      %s512 = smul.u32 8, %s511
      %p513 = scmp.lt.s32.totalorder %s512, 15
      %s514 = scalar_select %p513, %s512, 15
      %s515 = scalar_lea.vmem %s7, %s514
      %s516 = sadd.s32 %s24, %s25
      %s517 = smul.u32 8, %s516
      %p518 = scmp.lt.s32.totalorder %s24, 1
      %s519 = scalar_select %p518, %s24, 1
      %p520 = scmp.lt.s32.totalorder %s25, 0
      %s521 = scalar_select %p520, %s25, 0
      %s522 = sadd.s32 %s521, %s519
      %s523 = smul.addr %s522, 8
      %s524 = scalar_lea.vmem %s8, %s523
      %v525 = vlaneseq
      %v526 = vand.u32 %v525, 127
      %v527 = vadd.s32 %v526, 128
      %v528 = vadd.s32 %v526, 256
      %v529 = vadd.s32 %v526, 384
      %v530 = vadd.s32 %v526, 512
      %v531 = vadd.s32 %v526, 640
      %v532 = vadd.s32 %v526, 768
      %v533 = vadd.s32 %v526, 896
      %s534 = smul.u32 %s25, 1024
      %v535 = vstv %s534
      %v536 = vadd.s32 %v535, %v526
      %v537 = vadd.s32 %v535, %v527
      %v538 = vadd.s32 %v535, %v528
      %v539 = vadd.s32 %v535, %v529
      %v540 = vadd.s32 %v535, %v530
      %v541 = vadd.s32 %v535, %v531
      %v542 = vadd.s32 %v535, %v532
      %v543 = vadd.s32 %v535, %v533
      %vm544 = vcmp.lt.s32.totalorder %v536, 1024
      %vm545 = vcmp.lt.s32.totalorder %v537, 1024
      %vm546 = vcmp.lt.s32.totalorder %v538, 1024
      %vm547 = vcmp.lt.s32.totalorder %v539, 1024
      %vm548 = vcmp.lt.s32.totalorder %v540, 1024
      %vm549 = vcmp.lt.s32.totalorder %v541, 1024
      %vm550 = vcmp.lt.s32.totalorder %v542, 1024
      %vm551 = vcmp.lt.s32.totalorder %v543, 1024
      %v552 = vld [vmem:[%s457] sm:$0xff]
      %v553 = vld [vmem:[%s457 + $0x8] sm:$0xff]
      %v554 = vld [vmem:[%s457 + $0x10] sm:$0xff]
      %v555 = vld [vmem:[%s457 + $0x18] sm:$0xff]
      %v556 = vld [vmem:[%s457 + $0x20] sm:$0xff]
      %v557 = vld [vmem:[%s457 + $0x28] sm:$0xff]
      %v558 = vld [vmem:[%s457 + $0x30] sm:$0xff]
      %v559 = vld [vmem:[%s457 + $0x38] sm:$0xff]
      %v560 = vsel %vm544, 1, 0
      %v561 = vsel %vm545, 1, 0
      %v562 = vsel %vm546, 1, 0
      %v563 = vsel %vm547, 1, 0
      %v564 = vsel %vm548, 1, 0
      %v565 = vsel %vm549, 1, 0
      %v566 = vsel %vm550, 1, 0
      %v567 = vsel %vm551, 1, 0
      %vm568 = vcmp.eq.s32.totalorder %v560, 1
      %vm569 = vcmp.eq.s32.totalorder %v561, 1
      %vm570 = vcmp.eq.s32.totalorder %v562, 1
      %vm571 = vcmp.eq.s32.totalorder %v563, 1
      %vm572 = vcmp.eq.s32.totalorder %v564, 1
      %vm573 = vcmp.eq.s32.totalorder %v565, 1
      %vm574 = vcmp.eq.s32.totalorder %v566, 1
      %vm575 = vcmp.eq.s32.totalorder %v567, 1
      %v576 = vsel %vm568, %v552, 0.0
      %v577 = vsel %vm569, %v553, 0.0
      %v578 = vsel %vm570, %v554, 0.0
      %v579 = vsel %vm571, %v555, 0.0
      %v580 = vsel %vm572, %v556, 0.0
      %v581 = vsel %vm573, %v557, 0.0
      %v582 = vsel %vm574, %v558, 0.0
      %v583 = vsel %vm575, %v559, 0.0
      %v584 = vld [vmem:[%s466] sm:$0xff]
      %v585 = vperm.slane %v584, 0
      %v586 = vperm.slane %v584, 1
      %v587 = vperm.slane %v584, 2
      %v588 = vperm.slane %v584, 3
      %v589 = vperm.slane %v584, 4
      %v590 = vperm.slane %v584, 5
      %v591 = vperm.slane %v584, 6
      %v592 = vperm.slane %v584, 7
      %v593 = vsel %vm544, %v585, 0
      %v594 = vsel %vm545, %v586, 0
      %v595 = vsel %vm546, %v587, 0
      %v596 = vsel %vm547, %v588, 0
      %v597 = vsel %vm548, %v589, 0
      %v598 = vsel %vm549, %v590, 0
      %v599 = vsel %vm550, %v591, 0
      %v600 = vsel %vm551, %v592, 0
      %v601 = vld [vmem:[%s475] sm:$0xff]
      %v602 = vperm.slane %v601, 0
      %v603 = vperm.slane %v601, 1
      %v604 = vperm.slane %v601, 2
      %v605 = vperm.slane %v601, 3
      %v606 = vperm.slane %v601, 4
      %v607 = vperm.slane %v601, 5
      %v608 = vperm.slane %v601, 6
      %v609 = vperm.slane %v601, 7
      %v610 = vsel %vm544, %v602, 4294967295
      %v611 = vsel %vm545, %v603, 4294967295
      %v612 = vsel %vm546, %v604, 4294967295
      %v613 = vsel %vm547, %v605, 4294967295
      %v614 = vsel %vm548, %v606, 4294967295
      %v615 = vsel %vm549, %v607, 4294967295
      %v616 = vsel %vm550, %v608, 4294967295
      %v617 = vsel %vm551, %v609, 4294967295
      %v618 = vld [vmem:[%s484] sm:$0xff]
      %v620 = vperm.slane %v618, 0
      %v621 = vperm.slane %v618, 1
      %v622 = vperm.slane %v618, 2
      %v623 = vperm.slane %v618, 3
      %v624 = vperm.slane %v618, 4
      %v625 = vperm.slane %v618, 5
      %v626 = vperm.slane %v618, 6
      %v627 = vperm.slane %v618, 7
      %v636 = vsel %vm544, %v620, 0.5
      %v637 = vsel %vm545, %v621, 0.5
      %v638 = vsel %vm546, %v622, 0.5
      %v639 = vsel %vm547, %v623, 0.5
      %v640 = vsel %vm548, %v624, 0.5
      %v641 = vsel %vm549, %v625, 0.5
      %v642 = vsel %vm550, %v626, 0.5
      %v643 = vsel %vm551, %v627, 0.5
      %v644 = vld [vmem:[%s493] sm:$0xff]
      %v646 = vperm.slane %v644, 0
      %v647 = vperm.slane %v644, 1
      %v648 = vperm.slane %v644, 2
      %v649 = vperm.slane %v644, 3
      %v650 = vperm.slane %v644, 4
      %v651 = vperm.slane %v644, 5
      %v652 = vperm.slane %v644, 6
      %v653 = vperm.slane %v644, 7
      %v662 = vsel %vm544, %v646, 0.0
      %v663 = vsel %vm545, %v647, 0.0
      %v664 = vsel %vm546, %v648, 0.0
      %v665 = vsel %vm547, %v649, 0.0
      %v666 = vsel %vm548, %v650, 0.0
      %v667 = vsel %vm549, %v651, 0.0
      %v668 = vsel %vm550, %v652, 0.0
      %v669 = vsel %vm551, %v653, 0.0
      %v670 = vrot.slane %v576, 4
      %v671 = vmax.f32 %v576, %v670
      %v672 = vrot.slane %v671, 2
      %v673 = vmax.f32 %v671, %v672
      %v674 = vrot.slane %v673, 1
      %v675 = vmax.f32 %v673, %v674
      %v676 = vrot.slane %v577, 4
      %v677 = vmax.f32 %v577, %v676
      %v678 = vrot.slane %v677, 2
      %v679 = vmax.f32 %v677, %v678
      %v680 = vrot.slane %v679, 1
      %v681 = vmax.f32 %v679, %v680
      %v682 = vrot.slane %v578, 4
      %v683 = vmax.f32 %v578, %v682
      %v684 = vrot.slane %v683, 2
      %v685 = vmax.f32 %v683, %v684
      %v686 = vrot.slane %v685, 1
      %v687 = vmax.f32 %v685, %v686
      %v688 = vrot.slane %v579, 4
      %v689 = vmax.f32 %v579, %v688
      %v690 = vrot.slane %v689, 2
      %v691 = vmax.f32 %v689, %v690
      %v692 = vrot.slane %v691, 1
      %v693 = vmax.f32 %v691, %v692
      %v694 = vrot.slane %v580, 4
      %v695 = vmax.f32 %v580, %v694
      %v696 = vrot.slane %v695, 2
      %v697 = vmax.f32 %v695, %v696
      %v698 = vrot.slane %v697, 1
      %v699 = vmax.f32 %v697, %v698
      %v700 = vrot.slane %v581, 4
      %v701 = vmax.f32 %v581, %v700
      %v702 = vrot.slane %v701, 2
      %v703 = vmax.f32 %v701, %v702
      %v704 = vrot.slane %v703, 1
      %v705 = vmax.f32 %v703, %v704
      %v706 = vrot.slane %v582, 4
      %v707 = vmax.f32 %v582, %v706
      %v708 = vrot.slane %v707, 2
      %v709 = vmax.f32 %v707, %v708
      %v710 = vrot.slane %v709, 1
      %v711 = vmax.f32 %v709, %v710
      %v712 = vrot.slane %v583, 4
      %v713 = vmax.f32 %v583, %v712
      %v714 = vrot.slane %v713, 2
      %v715 = vmax.f32 %v713, %v714
      %v716 = vrot.slane %v715, 1
      %v717 = vmax.f32 %v715, %v716
      %v718 = vsub.f32 %v576, %v675
      %v719 = vsub.f32 %v577, %v681
      %v720 = vsub.f32 %v578, %v687
      %v721 = vsub.f32 %v579, %v693
      %v722 = vsub.f32 %v580, %v699
      %v723 = vsub.f32 %v581, %v705
      %v724 = vsub.f32 %v582, %v711
      %v725 = vsub.f32 %v583, %v717
      %v726 = vmul.f32 %v718, 1.442695
      %v727 = vpow.pop %v726
      %v728 = vmul.f32 %v719, 1.442695
      %v729 = vpow.pop %v728
      %v730 = vmul.f32 %v720, 1.442695
      %v731 = vpow.pop %v730
      %v732 = vmul.f32 %v721, 1.442695
      %v733 = vpow.pop %v732
      %v734 = vmul.f32 %v722, 1.442695
      %v735 = vpow.pop %v734
      %v736 = vmul.f32 %v723, 1.442695
      %v737 = vpow.pop %v736
      %v738 = vmul.f32 %v724, 1.442695
      %v739 = vpow.pop %v738
      %v740 = vmul.f32 %v725, 1.442695
      %v741 = vpow.pop %v740
      %v742 = vrot.slane %v727, 4
      %v743 = vadd.f32 %v727, %v742
      %v744 = vrot.slane %v743, 2
      %v745 = vadd.f32 %v743, %v744
      %v746 = vrot.slane %v745, 1
      %v747 = vadd.f32 %v745, %v746
      %v748 = vrot.slane %v729, 4
      %v749 = vadd.f32 %v729, %v748
      %v750 = vrot.slane %v749, 2
      %v751 = vadd.f32 %v749, %v750
      %v752 = vrot.slane %v751, 1
      %v753 = vadd.f32 %v751, %v752
      %v754 = vrot.slane %v731, 4
      %v755 = vadd.f32 %v731, %v754
      %v756 = vrot.slane %v755, 2
      %v757 = vadd.f32 %v755, %v756
      %v758 = vrot.slane %v757, 1
      %v759 = vadd.f32 %v757, %v758
      %v760 = vrot.slane %v733, 4
      %v761 = vadd.f32 %v733, %v760
      %v762 = vrot.slane %v761, 2
      %v763 = vadd.f32 %v761, %v762
      %v764 = vrot.slane %v763, 1
      %v765 = vadd.f32 %v763, %v764
      %v766 = vrot.slane %v735, 4
      %v767 = vadd.f32 %v735, %v766
      %v768 = vrot.slane %v767, 2
      %v769 = vadd.f32 %v767, %v768
      %v770 = vrot.slane %v769, 1
      %v771 = vadd.f32 %v769, %v770
      %v772 = vrot.slane %v737, 4
      %v773 = vadd.f32 %v737, %v772
      %v774 = vrot.slane %v773, 2
      %v775 = vadd.f32 %v773, %v774
      %v776 = vrot.slane %v775, 1
      %v777 = vadd.f32 %v775, %v776
      %v778 = vrot.slane %v739, 4
      %v779 = vadd.f32 %v739, %v778
      %v780 = vrot.slane %v779, 2
      %v781 = vadd.f32 %v779, %v780
      %v782 = vrot.slane %v781, 1
      %v783 = vadd.f32 %v781, %v782
      %v784 = vrot.slane %v741, 4
      %v785 = vadd.f32 %v741, %v784
      %v786 = vrot.slane %v785, 2
      %v787 = vadd.f32 %v785, %v786
      %v788 = vrot.slane %v787, 1
      %v789 = vadd.f32 %v787, %v788
      %v790 = vrcp.pop %v747
      %v791 = vrcp.pop %v753
      %v792 = vrcp.pop %v759
      %v793 = vrcp.pop %v765
      %v794 = vrcp.pop %v771
      %v795 = vrcp.pop %v777
      %v796 = vrcp.pop %v783
      %v797 = vrcp.pop %v789
      %v798 = vmul.f32 %v727, %v790
      %v799 = vmul.f32 %v729, %v791
      %v800 = vmul.f32 %v731, %v792
      %v801 = vmul.f32 %v733, %v793
      %v802 = vmul.f32 %v735, %v794
      %v803 = vmul.f32 %v737, %v795
      %v804 = vmul.f32 %v739, %v796
      %v805 = vmul.f32 %v741, %v797
      %v806 = vlog2.pop %v747
      %v807 = vmul.f32 %v806, 0.6931472
      %v808 = vlog2.pop %v753
      %v809 = vmul.f32 %v808, 0.6931472
      %v810 = vlog2.pop %v759
      %v811 = vmul.f32 %v810, 0.6931472
      %v812 = vlog2.pop %v765
      %v813 = vmul.f32 %v812, 0.6931472
      %v814 = vlog2.pop %v771
      %v815 = vmul.f32 %v814, 0.6931472
      %v816 = vlog2.pop %v777
      %v817 = vmul.f32 %v816, 0.6931472
      %v818 = vlog2.pop %v783
      %v819 = vmul.f32 %v818, 0.6931472
      %v820 = vlog2.pop %v789
      %v821 = vmul.f32 %v820, 0.6931472
      %v822 = vadd.f32 %v807, %v675
      %v823 = vadd.f32 %v809, %v681
      %v824 = vadd.f32 %v811, %v687
      %v825 = vadd.f32 %v813, %v693
      %v826 = vadd.f32 %v815, %v699
      %v827 = vadd.f32 %v817, %v705
      %v828 = vadd.f32 %v819, %v711
      %v829 = vadd.f32 %v821, %v717
      %v830 = vlaneseq
      %v831 = vshrl.u32 %v830, 7
      %v832 = vperm.slane %v593, 0
      %v833 = vperm.slane %v594, 0
      %v834 = vperm.slane %v595, 0
      %v835 = vperm.slane %v596, 0
      %v836 = vperm.slane %v597, 0
      %v837 = vperm.slane %v598, 0
      %v838 = vperm.slane %v599, 0
      %v839 = vperm.slane %v600, 0
      %vm840 = vcmp.eq.s32.totalorder %v831, %v832
      %vm841 = vcmp.eq.s32.totalorder %v831, %v833
      %vm842 = vcmp.eq.s32.totalorder %v831, %v834
      %vm843 = vcmp.eq.s32.totalorder %v831, %v835
      %vm844 = vcmp.eq.s32.totalorder %v831, %v836
      %vm845 = vcmp.eq.s32.totalorder %v831, %v837
      %vm846 = vcmp.eq.s32.totalorder %v831, %v838
      %vm847 = vcmp.eq.s32.totalorder %v831, %v839
      %v848 = vsel %vm840, 1, 0
      %v849 = vsel %vm841, 1, 0
      %v850 = vsel %vm842, 1, 0
      %v851 = vsel %vm843, 1, 0
      %v852 = vsel %vm844, 1, 0
      %v853 = vsel %vm845, 1, 0
      %v854 = vsel %vm846, 1, 0
      %v855 = vsel %vm847, 1, 0
      %v856 = vcvt.s32.f32 %v848
      %v857 = vcvt.s32.f32 %v849
      %v858 = vcvt.s32.f32 %v850
      %v859 = vcvt.s32.f32 %v851
      %v860 = vcvt.s32.f32 %v852
      %v861 = vcvt.s32.f32 %v853
      %v862 = vcvt.s32.f32 %v854
      %v863 = vcvt.s32.f32 %v855
      %vm864 = vcmp.ne.s32.totalorder %v593, 0
      %vm865 = vcmp.ne.s32.totalorder %v594, 0
      %vm866 = vcmp.ne.s32.totalorder %v595, 0
      %vm867 = vcmp.ne.s32.totalorder %v596, 0
      %vm868 = vcmp.ne.s32.totalorder %v597, 0
      %vm869 = vcmp.ne.s32.totalorder %v598, 0
      %vm870 = vcmp.ne.s32.totalorder %v599, 0
      %vm871 = vcmp.ne.s32.totalorder %v600, 0
      %v872 = vsel %vm864, 1, 0
      %v873 = vsel %vm865, 1, 0
      %v874 = vsel %vm866, 1, 0
      %v875 = vsel %vm867, 1, 0
      %v876 = vsel %vm868, 1, 0
      %v877 = vsel %vm869, 1, 0
      %v878 = vsel %vm870, 1, 0
      %v879 = vsel %vm871, 1, 0
      %v880 = vcvt.s32.f32 %v872
      %v881 = vcvt.s32.f32 %v873
      %v882 = vcvt.s32.f32 %v874
      %v883 = vcvt.s32.f32 %v875
      %v884 = vcvt.s32.f32 %v876
      %v885 = vcvt.s32.f32 %v877
      %v886 = vcvt.s32.f32 %v878
      %v887 = vcvt.s32.f32 %v879
      %v888 = vmul.f32 %v856, %v576
      %v889 = vmul.f32 %v857, %v577
      %v890 = vmul.f32 %v858, %v578
      %v891 = vmul.f32 %v859, %v579
      %v892 = vmul.f32 %v860, %v580
      %v893 = vmul.f32 %v861, %v581
      %v894 = vmul.f32 %v862, %v582
      %v895 = vmul.f32 %v863, %v583
      %v896 = vrot.slane %v888, 4
      %v897 = vadd.f32 %v888, %v896
      %v898 = vrot.slane %v897, 2
      %v899 = vadd.f32 %v897, %v898
      %v900 = vrot.slane %v899, 1
      %v901 = vadd.f32 %v899, %v900
      %v902 = vrot.slane %v889, 4
      %v903 = vadd.f32 %v889, %v902
      %v904 = vrot.slane %v903, 2
      %v905 = vadd.f32 %v903, %v904
      %v906 = vrot.slane %v905, 1
      %v907 = vadd.f32 %v905, %v906
      %v908 = vrot.slane %v890, 4
      %v909 = vadd.f32 %v890, %v908
      %v910 = vrot.slane %v909, 2
      %v911 = vadd.f32 %v909, %v910
      %v912 = vrot.slane %v911, 1
      %v913 = vadd.f32 %v911, %v912
      %v914 = vrot.slane %v891, 4
      %v915 = vadd.f32 %v891, %v914
      %v916 = vrot.slane %v915, 2
      %v917 = vadd.f32 %v915, %v916
      %v918 = vrot.slane %v917, 1
      %v919 = vadd.f32 %v917, %v918
      %v920 = vrot.slane %v892, 4
      %v921 = vadd.f32 %v892, %v920
      %v922 = vrot.slane %v921, 2
      %v923 = vadd.f32 %v921, %v922
      %v924 = vrot.slane %v923, 1
      %v925 = vadd.f32 %v923, %v924
      %v926 = vrot.slane %v893, 4
      %v927 = vadd.f32 %v893, %v926
      %v928 = vrot.slane %v927, 2
      %v929 = vadd.f32 %v927, %v928
      %v930 = vrot.slane %v929, 1
      %v931 = vadd.f32 %v929, %v930
      %v932 = vrot.slane %v894, 4
      %v933 = vadd.f32 %v894, %v932
      %v934 = vrot.slane %v933, 2
      %v935 = vadd.f32 %v933, %v934
      %v936 = vrot.slane %v935, 1
      %v937 = vadd.f32 %v935, %v936
      %v938 = vrot.slane %v895, 4
      %v939 = vadd.f32 %v895, %v938
      %v940 = vrot.slane %v939, 2
      %v941 = vadd.f32 %v939, %v940
      %v942 = vrot.slane %v941, 1
      %v943 = vadd.f32 %v941, %v942
      %v944 = vsub.f32 %v822, %v901
      %v945 = vsub.f32 %v823, %v907
      %v946 = vsub.f32 %v824, %v913
      %v947 = vsub.f32 %v825, %v919
      %v948 = vsub.f32 %v826, %v925
      %v949 = vsub.f32 %v827, %v931
      %v950 = vsub.f32 %v828, %v937
      %v951 = vsub.f32 %v829, %v943
      %v952 = vmul.f32 %v944, %v880
      %v953 = vmul.f32 %v945, %v881
      %v954 = vmul.f32 %v946, %v882
      %v955 = vmul.f32 %v947, %v883
      %v956 = vmul.f32 %v948, %v884
      %v957 = vmul.f32 %v949, %v885
      %v958 = vmul.f32 %v950, %v886
      %v959 = vmul.f32 %v951, %v887
      %v960 = vperm.slane %v880, 0
      %v961 = vperm.slane %v881, 0
      %v962 = vperm.slane %v882, 0
      %v963 = vperm.slane %v883, 0
      %v964 = vperm.slane %v884, 0
      %v965 = vperm.slane %v885, 0
      %v966 = vperm.slane %v886, 0
      %v967 = vperm.slane %v887, 0
      %v968 = vmul.f32 %v856, %v960
      %v969 = vmul.f32 %v857, %v961
      %v970 = vmul.f32 %v858, %v962
      %v971 = vmul.f32 %v859, %v963
      %v972 = vmul.f32 %v860, %v964
      %v973 = vmul.f32 %v861, %v965
      %v974 = vmul.f32 %v862, %v966
      %v975 = vmul.f32 %v863, %v967
      %v976 = vsub.f32 %v968, %v798
      %v977 = vsub.f32 %v969, %v799
      %v978 = vsub.f32 %v970, %v800
      %v979 = vsub.f32 %v971, %v801
      %v980 = vsub.f32 %v972, %v802
      %v981 = vsub.f32 %v973, %v803
      %v982 = vsub.f32 %v974, %v804
      %v983 = vsub.f32 %v975, %v805
      %v984 = vand.u32 2147483647, %v976
      %v985 = vand.u32 2147483647, %v977
      %v986 = vand.u32 2147483647, %v978
      %v987 = vand.u32 2147483647, %v979
      %v988 = vand.u32 2147483647, %v980
      %v989 = vand.u32 2147483647, %v981
      %v990 = vand.u32 2147483647, %v982
      %v991 = vand.u32 2147483647, %v983
      %v992 = vmul.f32 %v984, %v960
      %v993 = vmul.f32 %v985, %v961
      %v994 = vmul.f32 %v986, %v962
      %v995 = vmul.f32 %v987, %v963
      %v996 = vmul.f32 %v988, %v964
      %v997 = vmul.f32 %v989, %v965
      %v998 = vmul.f32 %v990, %v966
      %v999 = vmul.f32 %v991, %v967
      %v1000 = vsub.f32 0.0, %v992
      %v1001 = vsub.f32 0.0, %v993
      %v1002 = vsub.f32 0.0, %v994
      %v1003 = vsub.f32 0.0, %v995
      %v1004 = vsub.f32 0.0, %v996
      %v1005 = vsub.f32 0.0, %v997
      %v1006 = vsub.f32 0.0, %v998
      %v1007 = vsub.f32 0.0, %v999
      %1008 = vst [vmem:[%s500] sm:$0xff] %v1000
      %1009 = vst [vmem:[%s500 + $0x8] sm:$0xff] %v1001
      %1010 = vst [vmem:[%s500 + $0x10] sm:$0xff] %v1002
      %1011 = vst [vmem:[%s500 + $0x18] sm:$0xff] %v1003
      %1012 = vst [vmem:[%s500 + $0x20] sm:$0xff] %v1004
      %1013 = vst [vmem:[%s500 + $0x28] sm:$0xff] %v1005
      %1014 = vst [vmem:[%s500 + $0x30] sm:$0xff] %v1006
      %1015 = vst [vmem:[%s500 + $0x38] sm:$0xff] %v1007
      %v1016 = vpack.c.bf16 %v969, %v968
      %v1017 = vpack.c.bf16 %v971, %v970
      %v1018 = vpack.c.bf16 %v973, %v972
      %v1019 = vpack.c.bf16 %v975, %v974
      %1020 = vst [vmem:[%s508] sm:$0xff] %v1016
      %1021 = vst [vmem:[%s508 + $0x8] sm:$0xff] %v1017
      %1022 = vst [vmem:[%s508 + $0x10] sm:$0xff] %v1018
      %1023 = vst [vmem:[%s508 + $0x18] sm:$0xff] %v1019
      %v1024 = vrsqrt.pop %v662
      %v1025 = vmul.f32 %v1024, %v662
      %v1026 = vmul.f32 %v1025, %v1024
      %v1027 = vmul.f32 0.5, %v1026
      %v1028 = vsub.f32 1.5, %v1027
      %v1029 = vmul.f32 %v1024, %v1028
      %v1030 = vmul.f32 %v662, %v1029
      %vm1031 = vcmp.eq.f32.partialorder %v662, inf
      %v1032 = vsel %vm1031, %v662, %v1030
      %vm1033 = vcmp.eq.f32.partialorder %v662, 0.0
      %v1034 = vand.u32 %v662, 2147483648
      %v1035 = vsel %vm1033, %v1034, %v1032
      %v1036 = vrsqrt.pop %v663
      %v1037 = vmul.f32 %v1036, %v663
      %v1038 = vmul.f32 %v1037, %v1036
      %v1039 = vmul.f32 0.5, %v1038
      %v1040 = vsub.f32 1.5, %v1039
      %v1041 = vmul.f32 %v1036, %v1040
      %v1042 = vmul.f32 %v663, %v1041
      %vm1043 = vcmp.eq.f32.partialorder %v663, inf
      %v1044 = vsel %vm1043, %v663, %v1042
      %vm1045 = vcmp.eq.f32.partialorder %v663, 0.0
      %v1046 = vand.u32 %v663, 2147483648
      %v1047 = vsel %vm1045, %v1046, %v1044
      %v1048 = vrsqrt.pop %v664
      %v1049 = vmul.f32 %v1048, %v664
      %v1050 = vmul.f32 %v1049, %v1048
      %v1051 = vmul.f32 0.5, %v1050
      %v1052 = vsub.f32 1.5, %v1051
      %v1053 = vmul.f32 %v1048, %v1052
      %v1054 = vmul.f32 %v664, %v1053
      %vm1055 = vcmp.eq.f32.partialorder %v664, inf
      %v1056 = vsel %vm1055, %v664, %v1054
      %vm1057 = vcmp.eq.f32.partialorder %v664, 0.0
      %v1058 = vand.u32 %v664, 2147483648
      %v1059 = vsel %vm1057, %v1058, %v1056
      %v1060 = vrsqrt.pop %v665
      %v1061 = vmul.f32 %v1060, %v665
      %v1062 = vmul.f32 %v1061, %v1060
      %v1063 = vmul.f32 0.5, %v1062
      %v1064 = vsub.f32 1.5, %v1063
      %v1065 = vmul.f32 %v1060, %v1064
      %v1066 = vmul.f32 %v665, %v1065
      %vm1067 = vcmp.eq.f32.partialorder %v665, inf
      %v1068 = vsel %vm1067, %v665, %v1066
      %vm1069 = vcmp.eq.f32.partialorder %v665, 0.0
      %v1070 = vand.u32 %v665, 2147483648
      %v1071 = vsel %vm1069, %v1070, %v1068
      %v1072 = vrsqrt.pop %v666
      %v1073 = vmul.f32 %v1072, %v666
      %v1074 = vmul.f32 %v1073, %v1072
      %v1075 = vmul.f32 0.5, %v1074
      %v1076 = vsub.f32 1.5, %v1075
      %v1077 = vmul.f32 %v1072, %v1076
      %v1078 = vmul.f32 %v666, %v1077
      %vm1079 = vcmp.eq.f32.partialorder %v666, inf
      %v1080 = vsel %vm1079, %v666, %v1078
      %vm1081 = vcmp.eq.f32.partialorder %v666, 0.0
      %v1082 = vand.u32 %v666, 2147483648
      %v1083 = vsel %vm1081, %v1082, %v1080
      %v1084 = vrsqrt.pop %v667
      %v1085 = vmul.f32 %v1084, %v667
      %v1086 = vmul.f32 %v1085, %v1084
      %v1087 = vmul.f32 0.5, %v1086
      %v1088 = vsub.f32 1.5, %v1087
      %v1089 = vmul.f32 %v1084, %v1088
      %v1090 = vmul.f32 %v667, %v1089
      %vm1091 = vcmp.eq.f32.partialorder %v667, inf
      %v1092 = vsel %vm1091, %v667, %v1090
      %vm1093 = vcmp.eq.f32.partialorder %v667, 0.0
      %v1094 = vand.u32 %v667, 2147483648
      %v1095 = vsel %vm1093, %v1094, %v1092
      %v1096 = vrsqrt.pop %v668
      %v1097 = vmul.f32 %v1096, %v668
      %v1098 = vmul.f32 %v1097, %v1096
      %v1099 = vmul.f32 0.5, %v1098
      %v1100 = vsub.f32 1.5, %v1099
      %v1101 = vmul.f32 %v1096, %v1100
      %v1102 = vmul.f32 %v668, %v1101
      %vm1103 = vcmp.eq.f32.partialorder %v668, inf
      %v1104 = vsel %vm1103, %v668, %v1102
      %vm1105 = vcmp.eq.f32.partialorder %v668, 0.0
      %v1106 = vand.u32 %v668, 2147483648
      %v1107 = vsel %vm1105, %v1106, %v1104
      %v1108 = vrsqrt.pop %v669
      %v1109 = vmul.f32 %v1108, %v669
      %v1110 = vmul.f32 %v1109, %v1108
      %v1111 = vmul.f32 0.5, %v1110
      %v1112 = vsub.f32 1.5, %v1111
      %v1113 = vmul.f32 %v1108, %v1112
      %v1114 = vmul.f32 %v669, %v1113
      %vm1115 = vcmp.eq.f32.partialorder %v669, inf
      %v1116 = vsel %vm1115, %v669, %v1114
      %vm1117 = vcmp.eq.f32.partialorder %v669, 0.0
      %v1118 = vand.u32 %v669, 2147483648
      %v1119 = vsel %vm1117, %v1118, %v1116
      %vm1120 = vcmp.ge.s32.totalorder %v610, 0
      %vm1121 = vcmp.ge.s32.totalorder %v611, 0
      %vm1122 = vcmp.ge.s32.totalorder %v612, 0
      %vm1123 = vcmp.ge.s32.totalorder %v613, 0
      %vm1124 = vcmp.ge.s32.totalorder %v614, 0
      %vm1125 = vcmp.ge.s32.totalorder %v615, 0
      %vm1126 = vcmp.ge.s32.totalorder %v616, 0
      %vm1127 = vcmp.ge.s32.totalorder %v617, 0
      %v1128 = vsel %vm1120, 1, 0
      %v1129 = vsel %vm1121, 1, 0
      %v1130 = vsel %vm1122, 1, 0
      %v1131 = vsel %vm1123, 1, 0
      %v1132 = vsel %vm1124, 1, 0
      %v1133 = vsel %vm1125, 1, 0
      %v1134 = vsel %vm1126, 1, 0
      %v1135 = vsel %vm1127, 1, 0
      %v1136 = vcvt.s32.f32 %v1128
      %v1137 = vcvt.s32.f32 %v1129
      %v1138 = vcvt.s32.f32 %v1130
      %v1139 = vcvt.s32.f32 %v1131
      %v1140 = vcvt.s32.f32 %v1132
      %v1141 = vcvt.s32.f32 %v1133
      %v1142 = vcvt.s32.f32 %v1134
      %v1143 = vcvt.s32.f32 %v1135
      %v1144 = vsub.f32 0.0, %v662
      %v1145 = vsub.f32 0.0, %v663
      %v1146 = vsub.f32 0.0, %v664
      %v1147 = vsub.f32 0.0, %v665
      %v1148 = vsub.f32 0.0, %v666
      %v1149 = vsub.f32 0.0, %v667
      %v1150 = vsub.f32 0.0, %v668
      %v1151 = vsub.f32 0.0, %v669
      %v1152 = vmul.f32 %v1144, 0.5
      %v1153 = vmul.f32 %v1145, 0.5
      %v1154 = vmul.f32 %v1146, 0.5
      %v1155 = vmul.f32 %v1147, 0.5
      %v1156 = vmul.f32 %v1148, 0.5
      %v1157 = vmul.f32 %v1149, 0.5
      %v1158 = vmul.f32 %v1150, 0.5
      %v1159 = vmul.f32 %v1151, 0.5
      %v1160 = vmul.f32 %v1152, 1.442695
      %v1161 = vpow.pop %v1160
      %v1162 = vmul.f32 %v1153, 1.442695
      %v1163 = vpow.pop %v1162
      %v1164 = vmul.f32 %v1154, 1.442695
      %v1165 = vpow.pop %v1164
      %v1166 = vmul.f32 %v1155, 1.442695
      %v1167 = vpow.pop %v1166
      %v1168 = vmul.f32 %v1156, 1.442695
      %v1169 = vpow.pop %v1168
      %v1170 = vmul.f32 %v1157, 1.442695
      %v1171 = vpow.pop %v1170
      %v1172 = vmul.f32 %v1158, 1.442695
      %v1173 = vpow.pop %v1172
      %v1174 = vmul.f32 %v1159, 1.442695
      %v1175 = vpow.pop %v1174
      %v1176 = vmul.f32 %v1161, %v1136
      %v1177 = vmul.f32 %v1163, %v1137
      %v1178 = vmul.f32 %v1165, %v1138
      %v1179 = vmul.f32 %v1167, %v1139
      %v1180 = vmul.f32 %v1169, %v1140
      %v1181 = vmul.f32 %v1171, %v1141
      %v1182 = vmul.f32 %v1173, %v1142
      %v1183 = vmul.f32 %v1175, %v1143
      %v1184 = vadd.f32 %v636, 1e-12
      %v1185 = vadd.f32 %v637, 1e-12
      %v1186 = vadd.f32 %v638, 1e-12
      %v1187 = vadd.f32 %v639, 1e-12
      %v1188 = vadd.f32 %v640, 1e-12
      %v1189 = vadd.f32 %v641, 1e-12
      %v1190 = vadd.f32 %v642, 1e-12
      %v1191 = vadd.f32 %v643, 1e-12
      %v1192 = vlog2.pop %v1184
      %v1193 = vmul.f32 %v1192, 0.6931472
      %v1194 = vlog2.pop %v1185
      %v1195 = vmul.f32 %v1194, 0.6931472
      %v1196 = vlog2.pop %v1186
      %v1197 = vmul.f32 %v1196, 0.6931472
      %v1198 = vlog2.pop %v1187
      %v1199 = vmul.f32 %v1198, 0.6931472
      %v1200 = vlog2.pop %v1188
      %v1201 = vmul.f32 %v1200, 0.6931472
      %v1202 = vlog2.pop %v1189
      %v1203 = vmul.f32 %v1202, 0.6931472
      %v1204 = vlog2.pop %v1190
      %v1205 = vmul.f32 %v1204, 0.6931472
      %v1206 = vlog2.pop %v1191
      %v1207 = vmul.f32 %v1206, 0.6931472
      %v1208 = vmul.f32 %v1176, %v1193
      %v1209 = vmul.f32 %v1177, %v1195
      %v1210 = vmul.f32 %v1178, %v1197
      %v1211 = vmul.f32 %v1179, %v1199
      %v1212 = vmul.f32 %v1180, %v1201
      %v1213 = vmul.f32 %v1181, %v1203
      %v1214 = vmul.f32 %v1182, %v1205
      %v1215 = vmul.f32 %v1183, %v1207
      %v1216 = vsub.f32 1.0, %v1176
      %v1217 = vsub.f32 1.0, %v1177
      %v1218 = vsub.f32 1.0, %v1178
      %v1219 = vsub.f32 1.0, %v1179
      %v1220 = vsub.f32 1.0, %v1180
      %v1221 = vsub.f32 1.0, %v1181
      %v1222 = vsub.f32 1.0, %v1182
      %v1223 = vsub.f32 1.0, %v1183
      %v1224 = vsub.f32 1.0, %v636
      %v1225 = vsub.f32 1.0, %v637
      %v1226 = vsub.f32 1.0, %v638
      %v1227 = vsub.f32 1.0, %v639
      %v1228 = vsub.f32 1.0, %v640
      %v1229 = vsub.f32 1.0, %v641
      %v1230 = vsub.f32 1.0, %v642
      %v1231 = vsub.f32 1.0, %v643
      %v1232 = vadd.f32 %v1224, 1e-12
      %v1233 = vadd.f32 %v1225, 1e-12
      %v1234 = vadd.f32 %v1226, 1e-12
      %v1235 = vadd.f32 %v1227, 1e-12
      %v1236 = vadd.f32 %v1228, 1e-12
      %v1237 = vadd.f32 %v1229, 1e-12
      %v1238 = vadd.f32 %v1230, 1e-12
      %v1239 = vadd.f32 %v1231, 1e-12
      %v1240 = vlog2.pop %v1232
      %v1241 = vmul.f32 %v1240, 0.6931472
      %v1242 = vlog2.pop %v1233
      %v1243 = vmul.f32 %v1242, 0.6931472
      %v1244 = vlog2.pop %v1234
      %v1245 = vmul.f32 %v1244, 0.6931472
      %v1246 = vlog2.pop %v1235
      %v1247 = vmul.f32 %v1246, 0.6931472
      %v1248 = vlog2.pop %v1236
      %v1249 = vmul.f32 %v1248, 0.6931472
      %v1250 = vlog2.pop %v1237
      %v1251 = vmul.f32 %v1250, 0.6931472
      %v1252 = vlog2.pop %v1238
      %v1253 = vmul.f32 %v1252, 0.6931472
      %v1254 = vlog2.pop %v1239
      %v1255 = vmul.f32 %v1254, 0.6931472
      %v1256 = vmul.f32 %v1216, %v1241
      %v1257 = vmul.f32 %v1217, %v1243
      %v1258 = vmul.f32 %v1218, %v1245
      %v1259 = vmul.f32 %v1219, %v1247
      %v1260 = vmul.f32 %v1220, %v1249
      %v1261 = vmul.f32 %v1221, %v1251
      %v1262 = vmul.f32 %v1222, %v1253
      %v1263 = vmul.f32 %v1223, %v1255
      %v1264 = vadd.f32 %v1208, %v1256
      %v1265 = vadd.f32 %v1209, %v1257
      %v1266 = vadd.f32 %v1210, %v1258
      %v1267 = vadd.f32 %v1211, %v1259
      %v1268 = vadd.f32 %v1212, %v1260
      %v1269 = vadd.f32 %v1213, %v1261
      %v1270 = vadd.f32 %v1214, %v1262
      %v1271 = vadd.f32 %v1215, %v1263
      %v1272 = vsub.f32 0.0, %v1264
      %v1273 = vsub.f32 0.0, %v1265
      %v1274 = vsub.f32 0.0, %v1266
      %v1275 = vsub.f32 0.0, %v1267
      %v1276 = vsub.f32 0.0, %v1268
      %v1277 = vsub.f32 0.0, %v1269
      %v1278 = vsub.f32 0.0, %v1270
      %v1279 = vsub.f32 0.0, %v1271
      %vm1280 = vcmp.gt.f32.partialorder %v880, 0.0
      %vm1281 = vcmp.gt.f32.partialorder %v881, 0.0
      %vm1282 = vcmp.gt.f32.partialorder %v882, 0.0
      %vm1283 = vcmp.gt.f32.partialorder %v883, 0.0
      %vm1284 = vcmp.gt.f32.partialorder %v884, 0.0
      %vm1285 = vcmp.gt.f32.partialorder %v885, 0.0
      %vm1286 = vcmp.gt.f32.partialorder %v886, 0.0
      %vm1287 = vcmp.gt.f32.partialorder %v887, 0.0
      %v1288 = vsel %vm1280, %v1272, -inf
      %v1289 = vsel %vm1281, %v1273, -inf
      %v1290 = vsel %vm1282, %v1274, -inf
      %v1291 = vsel %vm1283, %v1275, -inf
      %v1292 = vsel %vm1284, %v1276, -inf
      %v1293 = vsel %vm1285, %v1277, -inf
      %v1294 = vsel %vm1286, %v1278, -inf
      %v1295 = vsel %vm1287, %v1279, -inf
      %v1304 = vrot.slane %v1289, 7
      %v1305 = vrot.slane %v1290, 6
      %v1306 = vrot.slane %v1291, 5
      %v1307 = vrot.slane %v1292, 4
      %v1308 = vrot.slane %v1293, 3
      %v1309 = vrot.slane %v1294, 2
      %v1310 = vrot.slane %v1295, 1
      %vm1311 = vcmask 1040384
      %v1312 = vsel %vm1311, %v1288, %v1304
      %vm1313 = vcmask 1042434
      %v1314 = vsel %vm1313, %v1305, %v1306
      %vm1315 = vcmask 1041408
      %v1316 = vsel %vm1315, %v1312, %v1314
      %vm1317 = vcmask 1044484
      %v1318 = vsel %vm1317, %v1307, %v1308
      %vm1319 = vcmask 1046534
      %v1320 = vsel %vm1319, %v1309, %v1310
      %vm1321 = vcmask 1045508
      %v1322 = vsel %vm1321, %v1318, %v1320
      %vm1323 = vcmask 1043456
      %v1324 = vsel %vm1323, %v1316, %v1322
      %1326 = vst [vmem:[%s515] sm:$0xff] %v1324
      %v1327 = vsel %vm1311, %v952, 0.0
      %v1328 = vsel %vm1311, %v953, 0.0
      %v1329 = vadd.f32 %v1327, %v1328
      %v1330 = vsel %vm1311, %v954, 0.0
      %v1331 = vadd.f32 %v1329, %v1330
      %v1332 = vsel %vm1311, %v955, 0.0
      %v1333 = vadd.f32 %v1331, %v1332
      %v1334 = vsel %vm1311, %v956, 0.0
      %v1335 = vadd.f32 %v1333, %v1334
      %v1336 = vsel %vm1311, %v957, 0.0
      %v1337 = vadd.f32 %v1335, %v1336
      %v1338 = vsel %vm1311, %v958, 0.0
      %v1339 = vadd.f32 %v1337, %v1338
      %v1340 = vsel %vm1311, %v959, 0.0
      %v1341 = vadd.f32 %v1339, %v1340
      %1342 = vadd.xlane.f32.xlu0 %v1341
      %v1343 = vpop.xlane.xlu0 %1342
      %v1344 = vrot.slane %v1343, 4
      %v1345 = vadd.f32 %v1343, %v1344
      %v1346 = vrot.slane %v1345, 2
      %v1347 = vadd.f32 %v1345, %v1346
      %v1348 = vrot.slane %v1347, 1
      %v1349 = vadd.f32 %v1347, %v1348
      %s1350 = vtos %v1349
      %v1351 = vsel %vm1311, %v880, 0.0
      %v1352 = vsel %vm1311, %v881, 0.0
      %v1353 = vadd.f32 %v1351, %v1352
      %v1354 = vsel %vm1311, %v882, 0.0
      %v1355 = vadd.f32 %v1353, %v1354
      %v1356 = vsel %vm1311, %v883, 0.0
      %v1357 = vadd.f32 %v1355, %v1356
      %v1358 = vsel %vm1311, %v884, 0.0
      %v1359 = vadd.f32 %v1357, %v1358
      %v1360 = vsel %vm1311, %v885, 0.0
      %v1361 = vadd.f32 %v1359, %v1360
      %v1362 = vsel %vm1311, %v886, 0.0
      %v1363 = vadd.f32 %v1361, %v1362
      %v1364 = vsel %vm1311, %v887, 0.0
      %v1365 = vadd.f32 %v1363, %v1364
      %1366 = vadd.xlane.f32.xlu0 %v1365
      %v1367 = vpop.xlane.xlu0 %1366
      %v1368 = vrot.slane %v1367, 4
      %v1369 = vadd.f32 %v1367, %v1368
      %v1370 = vrot.slane %v1369, 2
      %v1371 = vadd.f32 %v1369, %v1370
      %v1372 = vrot.slane %v1371, 1
      %v1373 = vadd.f32 %v1371, %v1372
      %s1374 = vtos %v1373
      %v1375 = vmul.f32 %v1035, %v1136
      %v1376 = vmul.f32 %v1047, %v1137
      %v1377 = vmul.f32 %v1059, %v1138
      %v1378 = vmul.f32 %v1071, %v1139
      %v1379 = vmul.f32 %v1083, %v1140
      %v1380 = vmul.f32 %v1095, %v1141
      %v1381 = vmul.f32 %v1107, %v1142
      %v1382 = vmul.f32 %v1119, %v1143
      %v1383 = vsel %vm1311, %v1375, 0.0
      %v1384 = vsel %vm1311, %v1376, 0.0
      %v1385 = vadd.f32 %v1383, %v1384
      %v1386 = vsel %vm1311, %v1377, 0.0
      %v1387 = vadd.f32 %v1385, %v1386
      %v1388 = vsel %vm1311, %v1378, 0.0
      %v1389 = vadd.f32 %v1387, %v1388
      %v1390 = vsel %vm1311, %v1379, 0.0
      %v1391 = vadd.f32 %v1389, %v1390
      %v1392 = vsel %vm1311, %v1380, 0.0
      %v1393 = vadd.f32 %v1391, %v1392
      %v1394 = vsel %vm1311, %v1381, 0.0
      %v1395 = vadd.f32 %v1393, %v1394
      %v1396 = vsel %vm1311, %v1382, 0.0
      %v1397 = vadd.f32 %v1395, %v1396
      %1398 = vadd.xlane.f32.xlu0 %v1397
      %v1399 = vpop.xlane.xlu0 %1398
      %v1400 = vrot.slane %v1399, 4
      %v1401 = vadd.f32 %v1399, %v1400
      %v1402 = vrot.slane %v1401, 2
      %v1403 = vadd.f32 %v1401, %v1402
      %v1404 = vrot.slane %v1403, 1
      %v1405 = vadd.f32 %v1403, %v1404
      %s1406 = vtos %v1405
      %v1407 = vsel %vm1311, %v1136, 0.0
      %v1408 = vsel %vm1311, %v1137, 0.0
      %v1409 = vadd.f32 %v1407, %v1408
      %v1410 = vsel %vm1311, %v1138, 0.0
      %v1411 = vadd.f32 %v1409, %v1410
      %v1412 = vsel %vm1311, %v1139, 0.0
      %v1413 = vadd.f32 %v1411, %v1412
      %v1414 = vsel %vm1311, %v1140, 0.0
      %v1415 = vadd.f32 %v1413, %v1414
      %v1416 = vsel %vm1311, %v1141, 0.0
      %v1417 = vadd.f32 %v1415, %v1416
      %v1418 = vsel %vm1311, %v1142, 0.0
      %v1419 = vadd.f32 %v1417, %v1418
      %v1420 = vsel %vm1311, %v1143, 0.0
      %v1421 = vadd.f32 %v1419, %v1420
      %1422 = vadd.xlane.f32.xlu0 %v1421
      %v1423 = vpop.xlane.xlu0 %1422
      %v1424 = vrot.slane %v1423, 4
      %v1425 = vadd.f32 %v1423, %v1424
      %v1426 = vrot.slane %v1425, 2
      %v1427 = vadd.f32 %v1425, %v1426
      %v1428 = vrot.slane %v1427, 1
      %v1429 = vadd.f32 %v1427, %v1428
      %s1430 = vtos %v1429
      %v1431 = vmul.f32 %v1272, %v880
      %v1432 = vmul.f32 %v1273, %v881
      %v1433 = vmul.f32 %v1274, %v882
      %v1434 = vmul.f32 %v1275, %v883
      %v1435 = vmul.f32 %v1276, %v884
      %v1436 = vmul.f32 %v1277, %v885
      %v1437 = vmul.f32 %v1278, %v886
      %v1438 = vmul.f32 %v1279, %v887
      %v1439 = vsel %vm1311, %v1431, 0.0
      %v1440 = vsel %vm1311, %v1432, 0.0
      %v1441 = vadd.f32 %v1439, %v1440
      %v1442 = vsel %vm1311, %v1433, 0.0
      %v1443 = vadd.f32 %v1441, %v1442
      %v1444 = vsel %vm1311, %v1434, 0.0
      %v1445 = vadd.f32 %v1443, %v1444
      %v1446 = vsel %vm1311, %v1435, 0.0
      %v1447 = vadd.f32 %v1445, %v1446
      %v1448 = vsel %vm1311, %v1436, 0.0
      %v1449 = vadd.f32 %v1447, %v1448
      %v1450 = vsel %vm1311, %v1437, 0.0
      %v1451 = vadd.f32 %v1449, %v1450
      %v1452 = vsel %vm1311, %v1438, 0.0
      %v1453 = vadd.f32 %v1451, %v1452
      %1454 = vadd.xlane.f32.xlu0 %v1453
      %v1455 = vpop.xlane.xlu0 %1454
      %v1456 = vrot.slane %v1455, 4
      %v1457 = vadd.f32 %v1455, %v1456
      %v1458 = vrot.slane %v1457, 2
      %v1459 = vadd.f32 %v1457, %v1458
      %v1460 = vrot.slane %v1459, 1
      %v1461 = vadd.f32 %v1459, %v1460
      %s1462 = vtos %v1461
      %vm1463 = vcmp.eq.s32.totalorder %v831, 0
      %v1464 = vstv %s1350
      %v1465 = vsel %vm1463, %v1464, 0.0
      %vm1466 = vcmp.eq.s32.totalorder %v831, 1
      %v1467 = vstv %s1374
      %v1468 = vsel %vm1466, %v1467, 0.0
      %v1469 = vadd.f32 %v1465, %v1468
      %vm1470 = vcmp.eq.s32.totalorder %v831, 2
      %v1471 = vstv %s1406
      %v1472 = vsel %vm1470, %v1471, 0.0
      %v1473 = vadd.f32 %v1469, %v1472
      %vm1474 = vcmp.eq.s32.totalorder %v831, 3
      %v1475 = vstv %s1430
      %v1476 = vsel %vm1474, %v1475, 0.0
      %v1477 = vadd.f32 %v1473, %v1476
      %vm1478 = vcmp.eq.s32.totalorder %v831, 4
      %v1479 = vstv %s1462
      %v1480 = vsel %vm1478, %v1479, 0.0
      %v1481 = vadd.f32 %v1477, %v1480
      %1482 = vst [vmem:[%s524] sm:$0xff] %v1481
      %s1483 = sadd.s32 %s24, %s25
      %s1484 = smul.u32 8, %s1483
      %p1485 = scmp.lt.s32.totalorder %s1484, 15
      %s1486 = scalar_select %p1485, %s1484, 15
      %s1487 = smul.addr %s1486, 8
      %s1488 = scalar_lea.vmem %s5, %s1487
      %s1489 = sadd.s32 %s24, %s25
      %s1490 = smul.u32 8, %s1489
      %p1491 = scmp.lt.s32.totalorder %s1490, 15
      %s1492 = scalar_select %p1491, %s1490, 15
      %s1493 = smul.addr %s1492, 4
      %s1494 = scalar_lea.vmem %s6, %s1493
      %s1495 = sadd.s32 %s24, %s25
      %s1496 = smul.u32 8, %s1495
      %p1497 = scmp.lt.s32.totalorder %s1496, 15
      %s1498 = scalar_select %p1497, %s1496, 15
      %s1499 = scalar_lea.vmem %s7, %s1498
      %p1500 = scmp.lt.s32.totalorder %s24, 1
      %s1501 = scalar_select %p1500, %s24, 1
      %p1502 = scmp.lt.s32.totalorder %s25, 0
      %s1503 = scalar_select %p1502, %s25, 0
      %s1504 = sadd.s32 %s1503, %s1501
      %s1505 = smul.addr %s1504, 8
      %s1506 = scalar_lea.vmem %s8, %s1505
      // Predicated region
      $region41: #{_panoptic_forward.1} parent=39 // pred_check
        %p1507 = pneg %p192
      $region42: #{_panoptic_forward.1} parent=39 // pred_check_branch
        %1509 = sbr.rel (%p1507) target = $region44
      $region43: #{_panoptic_forward.1} parent=39 // pred_region
        %s1510 = sadd.s32 %s24, %s25
        %s1511 = smul.u32 8, %s1510
      $region44: #{_panoptic_forward.1} parent=39 // pred_fallthru
        _
      // Predicated region
      $region45: #{_panoptic_forward.1} parent=39 // pred_check
        %p1512 = pneg %p220
      $region46: #{_panoptic_forward.1} parent=39 // pred_check_branch
        %1514 = sbr.rel (%p1512) target = $region48
      $region47: #{_panoptic_forward.1} parent=39 // pred_region
        %s1515 = sadd.s32 %s24, %s25
        %s1516 = smul.u32 8, %s1515
      $region48: #{_panoptic_forward.1} parent=39 // pred_fallthru
        _
      // Predicated region
      $region49: #{_panoptic_forward.1} parent=39 // pred_check
        %p1517 = pneg %p248
      $region50: #{_panoptic_forward.1} parent=39 // pred_check_branch
        %1519 = sbr.rel (%p1517) target = $region52
      $region51: #{_panoptic_forward.1} parent=39 // pred_region
        %s1520 = sadd.s32 %s24, %s25
        %s1521 = smul.u32 8, %s1520
      $region52: #{_panoptic_forward.1} parent=39 // pred_fallthru
        _
      // Predicated region
      $region53: #{_panoptic_forward.1} parent=39 // pred_check
        %p1522 = pneg %p276
      $region54: #{_panoptic_forward.1} parent=39 // pred_check_branch
        %1524 = sbr.rel (%p1522) target = $region56
      $region55: #{_panoptic_forward.1} parent=39 // pred_region
        _
      $region56: #{_panoptic_forward.1} parent=39 // pred_fallthru
        _
    $region40: #{_panoptic_forward.1} parent=5 // pred_fallthru
      _
    %p1525 = scmp.le.s32.totalorder 2, %s15
    // Predicated region
    $region57: #{_panoptic_forward.1} parent=5 // pred_check
      %p1526 = pneg %p1525
    $region58: #{_panoptic_forward.1} parent=5 // pred_check_branch
      %1528 = sbr.rel (%p1526) target = $region60
    $region59: #{_panoptic_forward.1} parent=5 // pred_region
      %s1529 = ssub.s32 %s15, 2
      // Predicated region
      $region61: #{_panoptic_forward.1} parent=59 // pred_check
        %p1530 = pneg %p198
      $region62: #{_panoptic_forward.1} parent=59 // pred_check_branch
        %1532 = sbr.rel (%p1530) target = $region64
      $region63: #{_panoptic_forward.1} parent=59 // pred_region
        %s1533 = sadd.s32 %s26, %s27
        %s1534 = smul.u32 8, %s1533
        %p1535 = scmp.lt.s32.totalorder %s1534, 15
        %s1536 = scalar_select %p1535, %s1534, 15
        %s1537 = smul.addr %s1536, 8
        %s1538 = scalar_lea.vmem %s5, %s1537
      $region64: #{_panoptic_forward.1} parent=59 // pred_fallthru
        _
      // Predicated region
      $region65: #{_panoptic_forward.1} parent=59 // pred_check
        %p1539 = pneg %p226
      $region66: #{_panoptic_forward.1} parent=59 // pred_check_branch
        %1541 = sbr.rel (%p1539) target = $region68
      $region67: #{_panoptic_forward.1} parent=59 // pred_region
        %s1542 = sadd.s32 %s26, %s27
        %s1543 = smul.u32 8, %s1542
        %p1544 = scmp.lt.s32.totalorder %s1543, 15
        %s1545 = scalar_select %p1544, %s1543, 15
        %s1546 = smul.addr %s1545, 4
        %s1547 = scalar_lea.vmem %s6, %s1546
      $region68: #{_panoptic_forward.1} parent=59 // pred_fallthru
        _
      // Predicated region
      $region69: #{_panoptic_forward.1} parent=59 // pred_check
        %p1548 = pneg %p254
      $region70: #{_panoptic_forward.1} parent=59 // pred_check_branch
        %1550 = sbr.rel (%p1548) target = $region72
      $region71: #{_panoptic_forward.1} parent=59 // pred_region
        %s1551 = sadd.s32 %s26, %s27
        %s1552 = smul.u32 8, %s1551
        %p1553 = scmp.lt.s32.totalorder %s1552, 15
        %s1554 = scalar_select %p1553, %s1552, 15
        %s1555 = scalar_lea.vmem %s7, %s1554
      $region72: #{_panoptic_forward.1} parent=59 // pred_fallthru
        _
      // Predicated region
      $region73: #{_panoptic_forward.1} parent=59 // pred_check
        %p1556 = pneg %p282
      $region74: #{_panoptic_forward.1} parent=59 // pred_check_branch
        %1558 = sbr.rel (%p1556) target = $region76
      $region75: #{_panoptic_forward.1} parent=59 // pred_region
        %p1559 = scmp.lt.s32.totalorder %s26, 1
        %s1560 = scalar_select %p1559, %s26, 1
        %p1561 = scmp.lt.s32.totalorder %s27, 0
        %s1562 = scalar_select %p1561, %s27, 0
        %s1563 = sadd.s32 %s1562, %s1560
        %s1564 = smul.addr %s1563, 8
        %s1565 = scalar_lea.vmem %s8, %s1564
      $region76: #{_panoptic_forward.1} parent=59 // pred_fallthru
        _
    $region60: #{_panoptic_forward.1} parent=5 // pred_fallthru
      _
  $region6: #{_panoptic_forward.1} parent=0 // loop_footer
    %s19 = sadd.s32 1, %s15
  $region7: #{_panoptic_forward.1} parent=0 // loop_footer_branch
    %14 = sbr.rel target = $region3
  $region8: #{_panoptic_forward.1} parent=0 // loop_exit
    _

</llo_original>
